<compile_context>
chip_gen: v7x
topology: tpu7x:2x2x1
jax: 0.10.0
libtpu: 0.0.40
codegen_flags: <defaults>
</compile_context>

<pallas_src>
import functools

import jax
import jax.numpy as jnp
from jax.experimental import pallas as pl
from jax.experimental.pallas import tpu as pltpu

NEG_SLOPE = 0.01   # F.leaky_relu default negative_slope


def _round_up(x, m):
    return ((x + m - 1) // m) * m


def _leaky_relu(x):
    # slope < 1, so max(x, slope*x) == leaky_relu(x); one mul + one max on the VPU.
    return jnp.maximum(x, NEG_SLOPE * x)


def qnetwork_kernel(x_ref,
                    w1_ref, b1_ref,
                    w2_ref, b2_ref,
                    w3_ref, b3_ref,
                    w4_ref, b4_ref,
                    out_ref,
                    *, precision):
    """Fused 4-layer MLP: 3x (matmul + bias + leaky_relu) + final matmul + bias.

    Matmuls run on the MXU with f32 accumulation; bias/activation in f32 on the VPU.
    Activations never leave vregs/VMEM between layers.
    """
    cdt = w1_ref.dtype  # compute dtype (f32 or bf16)

    # In-kernel cast of the state tile (no-op for f32).
    x = x_ref[...].astype(cdt)

    h = jnp.dot(x, w1_ref[...], preferred_element_type=jnp.float32,
                precision=precision) + b1_ref[...]
    h = _leaky_relu(h).astype(cdt)

    h = jnp.dot(h, w2_ref[...], preferred_element_type=jnp.float32,
                precision=precision) + b2_ref[...]
    h = _leaky_relu(h).astype(cdt)

    h = jnp.dot(h, w3_ref[...], preferred_element_type=jnp.float32,
                precision=precision) + b3_ref[...]
    h = _leaky_relu(h).astype(cdt)

    h = jnp.dot(h, w4_ref[...], preferred_element_type=jnp.float32,
                precision=precision) + b4_ref[...]

    out_ref[...] = h.astype(out_ref.dtype)


@functools.partial(jax.jit, static_argnames=("tb", "compute_dtype"))
def qnetwork_forward(state, params, *, tb=2048, compute_dtype=jnp.float32):
    """state: (B, state_size) f32; params: dict of (in, out) weights + (1, out) biases.

    Returns (B, action_size) f32.
    """
    B, state_size = state.shape
    action_size = params["w4"].shape[1]

    # Sublane granularity: 8 for f32, 16 for bf16 (avoid packed-sublane relayouts).
    sub = 16 if compute_dtype == jnp.bfloat16 else 8

    # Batch tile: as large as requested (amortize per-step overhead), but for big
    # batches keep >= ~4 grid steps so v7x can shard across its two TensorCores.
    tb_eff = max(sub, _round_up(min(tb, _round_up(B, sub)), sub))
    tb_eff = min(tb_eff, max(256, _round_up(pl.cdiv(B, 4), sub)))
    grid = pl.cdiv(B, tb_eff)   # ragged tail tile is masked on store

    # Weights/biases: tiny, cast once in the wrapper (no-op when compute_dtype=f32).
    w1 = params["w1"].astype(compute_dtype)
    w2 = params["w2"].astype(compute_dtype)
    w3 = params["w3"].astype(compute_dtype)
    w4 = params["w4"].astype(compute_dtype)
    b1, b2, b3, b4 = params["b1"], params["b2"], params["b3"], params["b4"]

    # f32 path: force exact MXU accumulation so it matches the pure-JAX reference.
    precision = (jax.lax.Precision.HIGHEST
                 if compute_dtype == jnp.float32 else None)

    def resident(arr):
        # Whole array as one block, same block every grid step -> stays VMEM-resident.
        return pl.BlockSpec(arr.shape, lambda i: (0, 0))

    out = pl.pallas_call(
        functools.partial(qnetwork_kernel, precision=precision),
        out_shape=jax.ShapeDtypeStruct((B, action_size), jnp.float32),
        grid=(grid,),
        in_specs=[
            pl.BlockSpec((tb_eff, state_size), lambda i: (i, 0)),   # x: tiled on batch
            resident(w1), resident(b1),
            resident(w2), resident(b2),
            resident(w3), resident(b3),
            resident(w4), resident(b4),
        ],
        out_specs=pl.BlockSpec((tb_eff, action_size), lambda i: (i, 0)),
        compiler_params=pltpu.CompilerParams(
            dimension_semantics=("parallel",)),
    )(state, w1, b1, w2, b2, w3, b3, w4, b4)

    return out


def init_params(key, state_size, action_size):
    """Deterministic init mirroring nn.Linear default (uniform +/- 1/sqrt(fan_in)).

    Weights are stored as (in, out) — the transpose of PyTorch's (out, in).
    """
    sizes = [(state_size, 16), (16, 32), (32, 64), (64, action_size)]
    params = {}
    for idx, (fan_in, fan_out) in enumerate(sizes, start=1):
        key, kw, kb = jax.random.split(key, 3)
        bound = 1.0 / (fan_in ** 0.5)
        params[f"w{idx}"] = jax.random.uniform(
            kw, (fan_in, fan_out), jnp.float32, minval=-bound, maxval=bound)
        params[f"b{idx}"] = jax.random.uniform(
            kb, (1, fan_out), jnp.float32, minval=-bound, maxval=bound)
    return params


def reference_forward(state, params):
    """Pure-JAX f32 reference of the same forward pass."""
    h = state
    for i in range(1, 4):
        h = h @ params[f"w{i}"] + params[f"b{i}"]
        h = jnp.where(h > 0, h, NEG_SLOPE * h)
    return h @ params["w4"] + params["b4"]


if __name__ == "__main__":
    state_size = 8
    action_size = 4

    key = jax.random.PRNGKey(0)
    key, kparams, ks1, ks2 = jax.random.split(key, 4)
    params = init_params(kparams, state_size, action_size)

    # --- test 1: tiny batch, f32 compute (HIGHEST precision) -> tight agreement ---
    batch = 8
    state = jax.random.normal(ks1, (batch, state_size), jnp.float32)
    out_f32 = qnetwork_forward(state, params, compute_dtype=jnp.float32)
    out_f32 = jax.block_until_ready(out_f32)
    ref = reference_forward(state, params)
    assert out_f32.shape == (batch, action_size), out_f32.shape
    assert jnp.allclose(out_f32, ref, atol=1e-5, rtol=1e-5), "f32 mismatch vs reference"

    # --- test 2: non-tile-aligned batch, bf16 compute, multi-step grid + ragged tail ---
    batch2 = 200
    state2 = jax.random.normal(ks2, (batch2, state_size), jnp.float32)
    out_bf16 = qnetwork_forward(state2, params, tb=64, compute_dtype=jnp.bfloat16)
    out_bf16 = jax.block_until_ready(out_bf16)
    ref2 = reference_forward(state2, params)
    assert out_bf16.shape == (batch2, action_size), out_bf16.shape
    assert jnp.allclose(out_bf16, ref2, atol=5e-2, rtol=5e-2), "bf16 mismatch vs reference"

    print("KERNEL_OK")
</pallas_src>

<mosaic_0001>
module attributes {stable_mosaic.version = 11 : i64} {
  func.func @qnetwork_kernel(%arg0: i32, %arg1: memref<8x8xf32, #tpu.memory_space<vmem>>, %arg2: memref<8x16xf32, #tpu.memory_space<vmem>>, %arg3: memref<1x16xf32, #tpu.memory_space<vmem>>, %arg4: memref<16x32xf32, #tpu.memory_space<vmem>>, %arg5: memref<1x32xf32, #tpu.memory_space<vmem>>, %arg6: memref<32x64xf32, #tpu.memory_space<vmem>>, %arg7: memref<1x64xf32, #tpu.memory_space<vmem>>, %arg8: memref<64x4xf32, #tpu.memory_space<vmem>>, %arg9: memref<1x4xf32, #tpu.memory_space<vmem>>, %arg10: memref<8x4xf32, #tpu.memory_space<vmem>>) attributes {dimension_semantics = [#tpu.dimension_semantics<parallel>], iteration_bounds = array<i64: 1>, scalar_prefetch = 0 : i64, scratch_operands = 0 : i64, tpu.core_type = #tpu.core_type<tc>, window_params = [{transform_indices = @transform_0, window_bounds = array<i64: 8, 8>}, {pipeline_mode = #tpu.pipeline_mode<synchronous>, transform_indices = @transform_1, window_bounds = array<i64: 8, 16>}, {pipeline_mode = #tpu.pipeline_mode<synchronous>, transform_indices = @transform_2, window_bounds = array<i64: 1, 16>}, {pipeline_mode = #tpu.pipeline_mode<synchronous>, transform_indices = @transform_3, window_bounds = array<i64: 16, 32>}, {pipeline_mode = #tpu.pipeline_mode<synchronous>, transform_indices = @transform_4, window_bounds = array<i64: 1, 32>}, {pipeline_mode = #tpu.pipeline_mode<synchronous>, transform_indices = @transform_5, window_bounds = array<i64: 32, 64>}, {pipeline_mode = #tpu.pipeline_mode<synchronous>, transform_indices = @transform_6, window_bounds = array<i64: 1, 64>}, {pipeline_mode = #tpu.pipeline_mode<synchronous>, transform_indices = @transform_7, window_bounds = array<i64: 64, 4>}, {pipeline_mode = #tpu.pipeline_mode<synchronous>, transform_indices = @transform_8, window_bounds = array<i64: 1, 4>}, {transform_indices = @transform_9, window_bounds = array<i64: 8, 4>}]} {
    %c0 = arith.constant 0 : index
    %c0_0 = arith.constant 0 : index
    %0 = vector.load %arg1[%c0, %c0_0] : memref<8x8xf32, #tpu.memory_space<vmem>>, vector<8x8xf32>
    %c0_1 = arith.constant 0 : index
    %c0_2 = arith.constant 0 : index
    %1 = vector.load %arg2[%c0_1, %c0_2] : memref<8x16xf32, #tpu.memory_space<vmem>>, vector<8x16xf32>
    %cst = arith.constant dense<0.000000e+00> : vector<8x16xf32>
    %2 = tpu.matmul %0, %1, %cst {dimension_numbers = #tpu.dot_dimension_numbers<[1], [0], [0], [1], [0, 0, 1, 1], [], []>, precision = #tpu.contract_precision<fp32>} : vector<8x8xf32>, vector<8x16xf32>, vector<8x16xf32> -> vector<8x16xf32>
    %c0_3 = arith.constant 0 : index
    %c0_4 = arith.constant 0 : index
    %3 = vector.load %arg3[%c0_3, %c0_4] : memref<1x16xf32, #tpu.memory_space<vmem>>, vector<1x16xf32>
    %4 = vector.broadcast %3 : vector<1x16xf32> to vector<8x16xf32>
    %5 = arith.addf %2, %4 : vector<8x16xf32>
    %cst_5 = arith.constant 0.00999999977 : f32
    %6 = vector.broadcast %cst_5 : f32 to vector<8x16xf32>
    %7 = arith.mulf %6, %5 : vector<8x16xf32>
    %8 = arith.maximumf %5, %7 : vector<8x16xf32>
    %c0_6 = arith.constant 0 : index
    %c0_7 = arith.constant 0 : index
    %9 = vector.load %arg4[%c0_6, %c0_7] : memref<16x32xf32, #tpu.memory_space<vmem>>, vector<16x32xf32>
    %cst_8 = arith.constant dense<0.000000e+00> : vector<8x32xf32>
    %10 = tpu.matmul %8, %9, %cst_8 {dimension_numbers = #tpu.dot_dimension_numbers<[1], [0], [0], [1], [0, 0, 1, 1], [], []>, precision = #tpu.contract_precision<fp32>} : vector<8x16xf32>, vector<16x32xf32>, vector<8x32xf32> -> vector<8x32xf32>
    %c0_9 = arith.constant 0 : index
    %c0_10 = arith.constant 0 : index
    %11 = vector.load %arg5[%c0_9, %c0_10] : memref<1x32xf32, #tpu.memory_space<vmem>>, vector<1x32xf32>
    %12 = vector.broadcast %11 : vector<1x32xf32> to vector<8x32xf32>
    %13 = arith.addf %10, %12 : vector<8x32xf32>
    %cst_11 = arith.constant 0.00999999977 : f32
    %14 = vector.broadcast %cst_11 : f32 to vector<8x32xf32>
    %15 = arith.mulf %14, %13 : vector<8x32xf32>
    %16 = arith.maximumf %13, %15 : vector<8x32xf32>
    %c0_12 = arith.constant 0 : index
    %c0_13 = arith.constant 0 : index
    %17 = vector.load %arg6[%c0_12, %c0_13] : memref<32x64xf32, #tpu.memory_space<vmem>>, vector<32x64xf32>
    %cst_14 = arith.constant dense<0.000000e+00> : vector<8x64xf32>
    %18 = tpu.matmul %16, %17, %cst_14 {dimension_numbers = #tpu.dot_dimension_numbers<[1], [0], [0], [1], [0, 0, 1, 1], [], []>, precision = #tpu.contract_precision<fp32>} : vector<8x32xf32>, vector<32x64xf32>, vector<8x64xf32> -> vector<8x64xf32>
    %c0_15 = arith.constant 0 : index
    %c0_16 = arith.constant 0 : index
    %19 = vector.load %arg7[%c0_15, %c0_16] : memref<1x64xf32, #tpu.memory_space<vmem>>, vector<1x64xf32>
    %20 = vector.broadcast %19 : vector<1x64xf32> to vector<8x64xf32>
    %21 = arith.addf %18, %20 : vector<8x64xf32>
    %cst_17 = arith.constant 0.00999999977 : f32
    %22 = vector.broadcast %cst_17 : f32 to vector<8x64xf32>
    %23 = arith.mulf %22, %21 : vector<8x64xf32>
    %24 = arith.maximumf %21, %23 : vector<8x64xf32>
    %c0_18 = arith.constant 0 : index
    %c0_19 = arith.constant 0 : index
    %25 = vector.load %arg8[%c0_18, %c0_19] : memref<64x4xf32, #tpu.memory_space<vmem>>, vector<64x4xf32>
    %cst_20 = arith.constant dense<0.000000e+00> : vector<8x4xf32>
    %26 = tpu.matmul %24, %25, %cst_20 {dimension_numbers = #tpu.dot_dimension_numbers<[1], [0], [0], [1], [0, 0, 1, 1], [], []>, precision = #tpu.contract_precision<fp32>} : vector<8x64xf32>, vector<64x4xf32>, vector<8x4xf32> -> vector<8x4xf32>
    %c0_21 = arith.constant 0 : index
    %c0_22 = arith.constant 0 : index
    %27 = vector.load %arg9[%c0_21, %c0_22] : memref<1x4xf32, #tpu.memory_space<vmem>>, vector<1x4xf32>
    %28 = vector.broadcast %27 : vector<1x4xf32> to vector<8x4xf32>
    %29 = arith.addf %26, %28 : vector<8x4xf32>
    %c0_23 = arith.constant 0 : index
    %c0_24 = arith.constant 0 : index
    %30 = vector.load %arg10[%c0_23, %c0_24] : memref<8x4xf32, #tpu.memory_space<vmem>>, vector<8x4xf32>
    tpu.vector_store %arg10[%c0_23, %c0_24], %29 {strides = array<i32>} : memref<8x4xf32, #tpu.memory_space<vmem>>, vector<8x4xf32>,
    return
  }
  func.func @transform_0(%arg0: i32) -> (i32, i32) {
    %c0_i32 = arith.constant 0 : i32
    %c0_i32_0 = arith.constant 0 : i32
    return %arg0, %c0_i32 : i32, i32
  }
  func.func @transform_1(%arg0: i32) -> (i32, i32) {
    %c0_i32 = arith.constant 0 : i32
    %c0_i32_0 = arith.constant 0 : i32
    %c0_i32_1 = arith.constant 0 : i32
    return %c0_i32, %c0_i32_0 : i32, i32
  }
  func.func @transform_2(%arg0: i32) -> (i32, i32) {
    %c0_i32 = arith.constant 0 : i32
    %c0_i32_0 = arith.constant 0 : i32
    %c0_i32_1 = arith.constant 0 : i32
    return %c0_i32, %c0_i32_0 : i32, i32
  }
  func.func @transform_3(%arg0: i32) -> (i32, i32) {
    %c0_i32 = arith.constant 0 : i32
    %c0_i32_0 = arith.constant 0 : i32
    %c0_i32_1 = arith.constant 0 : i32
    return %c0_i32, %c0_i32_0 : i32, i32
  }
  func.func @transform_4(%arg0: i32) -> (i32, i32) {
    %c0_i32 = arith.constant 0 : i32
    %c0_i32_0 = arith.constant 0 : i32
    %c0_i32_1 = arith.constant 0 : i32
    return %c0_i32, %c0_i32_0 : i32, i32
  }
  func.func @transform_5(%arg0: i32) -> (i32, i32) {
    %c0_i32 = arith.constant 0 : i32
    %c0_i32_0 = arith.constant 0 : i32
    %c0_i32_1 = arith.constant 0 : i32
    return %c0_i32, %c0_i32_0 : i32, i32
  }
  func.func @transform_6(%arg0: i32) -> (i32, i32) {
    %c0_i32 = arith.constant 0 : i32
    %c0_i32_0 = arith.constant 0 : i32
    %c0_i32_1 = arith.constant 0 : i32
    return %c0_i32, %c0_i32_0 : i32, i32
  }
  func.func @transform_7(%arg0: i32) -> (i32, i32) {
    %c0_i32 = arith.constant 0 : i32
    %c0_i32_0 = arith.constant 0 : i32
    %c0_i32_1 = arith.constant 0 : i32
    return %c0_i32, %c0_i32_0 : i32, i32
  }
  func.func @transform_8(%arg0: i32) -> (i32, i32) {
    %c0_i32 = arith.constant 0 : i32
    %c0_i32_0 = arith.constant 0 : i32
    %c0_i32_1 = arith.constant 0 : i32
    return %c0_i32, %c0_i32_0 : i32, i32
  }
  func.func @transform_9(%arg0: i32) -> (i32, i32) {
    %c0_i32 = arith.constant 0 : i32
    %c0_i32_0 = arith.constant 0 : i32
    return %arg0, %c0_i32 : i32, i32
  }
}

</mosaic_0001>

<llo_original>
// kernel: qnetwork_forward.1
$region0: #{qnetwork_forward.1}
  #allocation0 [shape = 'u32[]', space=smem, size = 0x4, offset = 0x4, fixed_abs, tag = 'smem constant byte address 0x4 - core index']
  #allocation1 [shape = 'u32[144,128]{1,0:T(1,128)}', space=vmem, size = 0x12000, scoped, tag = 'internal scratch']
  %s0 = inlined_call_operand.vmem [shape: f32[8,8], index: 0, kind: input, shape index: {}]
  %s1 = inlined_call_operand.vmem [shape: f32[8,16], index: 1, kind: input, shape index: {}]
  %s2 = inlined_call_operand.vmem [shape: f32[1,16], index: 2, kind: input, shape index: {}]
  %s3 = inlined_call_operand.vmem [shape: f32[16,32], index: 3, kind: input, shape index: {}]
  %s4 = inlined_call_operand.vmem [shape: f32[1,32], index: 4, kind: input, shape index: {}]
  %s5 = inlined_call_operand.vmem [shape: f32[32,64], index: 5, kind: input, shape index: {}]
  %s6 = inlined_call_operand.vmem [shape: f32[1,64], index: 6, kind: input, shape index: {}]
  %s7 = inlined_call_operand.vmem [shape: f32[64,4], index: 7, kind: input, shape index: {}]
  %s8 = inlined_call_operand.vmem [shape: f32[1,4], index: 8, kind: input, shape index: {}]
  %s9 = inlined_call_operand.vmem [shape: f32[8,4], index: 9, kind: output, shape index: {}]
  %s10 = sld [smem:[#allocation0]]
  $region46: #{qnetwork_forward.1} parent=0
    _
  %s12 = ssub.s32 1, %s10
  %s13 = scalar_select 0, %s12, %s10
  // Predicated region
  $region2: #{qnetwork_forward.1} parent=0 // pred_check
    _
  $region3: #{qnetwork_forward.1} parent=0 // pred_check_branch
    %15 = sbr.rel (0) target = $region5
  $region4: #{qnetwork_forward.1} parent=0 // pred_region
    _
  $region5: #{qnetwork_forward.1} parent=0 // pred_fallthru
    _
  // Predicated region
  $region6: #{qnetwork_forward.1} parent=0 // pred_check
    _
  $region7: #{qnetwork_forward.1} parent=0 // pred_check_branch
    %17 = sbr.rel (0) target = $region9
  $region8: #{qnetwork_forward.1} parent=0 // pred_region
    _
  $region9: #{qnetwork_forward.1} parent=0 // pred_fallthru
    _
  // Predicated region
  $region10: #{qnetwork_forward.1} parent=0 // pred_check
    _
  $region11: #{qnetwork_forward.1} parent=0 // pred_check_branch
    %19 = sbr.rel (0) target = $region13
  $region12: #{qnetwork_forward.1} parent=0 // pred_region
    _
  $region13: #{qnetwork_forward.1} parent=0 // pred_fallthru
    _
  // Predicated region
  $region14: #{qnetwork_forward.1} parent=0 // pred_check
    _
  $region15: #{qnetwork_forward.1} parent=0 // pred_check_branch
    %21 = sbr.rel (0) target = $region17
  $region16: #{qnetwork_forward.1} parent=0 // pred_region
    _
  $region17: #{qnetwork_forward.1} parent=0 // pred_fallthru
    _
  // Predicated region
  $region18: #{qnetwork_forward.1} parent=0 // pred_check
    _
  $region19: #{qnetwork_forward.1} parent=0 // pred_check_branch
    %23 = sbr.rel (0) target = $region21
  $region20: #{qnetwork_forward.1} parent=0 // pred_region
    _
  $region21: #{qnetwork_forward.1} parent=0 // pred_fallthru
    _
  // Predicated region
  $region22: #{qnetwork_forward.1} parent=0 // pred_check
    _
  $region23: #{qnetwork_forward.1} parent=0 // pred_check_branch
    %25 = sbr.rel (0) target = $region25
  $region24: #{qnetwork_forward.1} parent=0 // pred_region
    _
  $region25: #{qnetwork_forward.1} parent=0 // pred_fallthru
    _
  // Predicated region
  $region26: #{qnetwork_forward.1} parent=0 // pred_check
    _
  $region27: #{qnetwork_forward.1} parent=0 // pred_check_branch
    %27 = sbr.rel (0) target = $region29
  $region28: #{qnetwork_forward.1} parent=0 // pred_region
    _
  $region29: #{qnetwork_forward.1} parent=0 // pred_fallthru
    _
  // Predicated region
  $region30: #{qnetwork_forward.1} parent=0 // pred_check
    _
  $region31: #{qnetwork_forward.1} parent=0 // pred_check_branch
    %29 = sbr.rel (0) target = $region33
  $region32: #{qnetwork_forward.1} parent=0 // pred_region
    _
  $region33: #{qnetwork_forward.1} parent=0 // pred_fallthru
    _
  // Predicated region
  $region34: #{qnetwork_forward.1} parent=0 // pred_check
    _
  $region35: #{qnetwork_forward.1} parent=0 // pred_check_branch
    %31 = sbr.rel (0) target = $region37
  $region36: #{qnetwork_forward.1} parent=0 // pred_region
    _
  $region37: #{qnetwork_forward.1} parent=0 // pred_fallthru
    _
  %v32 = vld [vmem:[%s0] sm:$0xff]
  %v33 = vld [vmem:[%s1] sm:$0xff]
  %v34 = vld [vmem:[%s2] sm:$0x1]
  %v36 = vlaneseq
  %v37 = vshrl.u32 %v36, 7
  %v38 = vsub.s32 0, %v37
  %v39 = vrot.slane %v34, %v38
  %vm41 = vcmask 64512
  %v43 = vsel %vm41, %v32, 0
  %45 = vmatprep.subr.mxu0 0.0
  %v46 = vand.u32 %v33, 4294901760
  %47 = vmatpush1.msra.mxu0 %v46
  %48 = vmatprep.subr.mxu0 0.0
  %49 = vmatpush1.msra.mxu0 0.0
  %50 = vmatprep.subr.mxu0 0.0
  %51 = vmatpush1.msra.mxu0 0.0
  %52 = vmatprep.subr.mxu0 0.0
  %53 = vmatpush1.msra.mxu0 0.0
  %54 = vmatprep.subr.mxu0 0.0
  %55 = vmatpush1.msra.mxu0 0.0
  %56 = vmatprep.subr.mxu0 0.0
  %57 = vmatpush1.msra.mxu0 0.0
  %58 = vmatprep.subr.mxu0 0.0
  %59 = vmatpush1.msra.mxu0 0.0
  %60 = vmatprep.subr.mxu0 0.0
  %61 = vmatpush1.msra.mxu0 0.0
  %62 = vmatprep.subr.mxu0 0.0
  %63 = vmatpush1.msra.mxu0 0.0
  %64 = vmatprep.subr.mxu0 0.0
  %65 = vmatpush1.msra.mxu0 0.0
  %66 = vmatprep.subr.mxu0 0.0
  %67 = vmatpush1.msra.mxu0 0.0
  %68 = vmatprep.subr.mxu0 0.0
  %69 = vmatpush1.msra.mxu0 0.0
  %70 = vmatprep.subr.mxu0 0.0
  %71 = vmatpush1.msra.mxu0 0.0
  %72 = vmatprep.subr.mxu0 0.0
  %73 = vmatpush1.msra.mxu0 0.0
  %74 = vmatprep.subr.mxu0 0.0
  %75 = vmatpush1.msra.mxu0 0.0
  %76 = vmatprep.subr.mxu0 0.0
  %77 = vmatpush1.msra.mxu0 0.0
  %78 = vmatprep.subr.mxu0 0.0
  %79 = vmatpush1.msra.mxu0 0.0
  %80 = vmatprep.subr.mxu0 0.0
  %81 = vmatpush1.msra.mxu0 0.0
  %82 = vmatprep.subr.mxu0 0.0
  %83 = vmatpush1.msra.mxu0 0.0
  %84 = vmatprep.subr.mxu0 0.0
  %85 = vmatpush1.msra.mxu0 0.0
  %86 = vmatprep.subr.mxu0 0.0
  %87 = vmatpush1.msra.mxu0 0.0
  %88 = vmatprep.subr.mxu0 0.0
  %89 = vmatpush1.msra.mxu0 0.0
  %90 = vmatprep.subr.mxu0 0.0
  %91 = vmatpush1.msra.mxu0 0.0
  %92 = vmatprep.subr.mxu0 0.0
  %93 = vmatpush1.msra.mxu0 0.0
  %94 = vmatprep.subr.mxu0 0.0
  %95 = vmatpush1.msra.mxu0 0.0
  %96 = vmatprep.subr.mxu0 0.0
  %97 = vmatpush1.msra.mxu0 0.0
  %98 = vmatprep.subr.mxu0 0.0
  %99 = vmatpush1.msra.mxu0 0.0
  %100 = vmatprep.subr.mxu0 0.0
  %101 = vmatpush1.msra.mxu0 0.0
  %102 = vmatprep.subr.mxu0 0.0
  %103 = vmatpush1.msra.mxu0 0.0
  %104 = vmatprep.subr.mxu0 0.0
  %105 = vmatpush1.msra.mxu0 0.0
  %106 = vmatprep.subr.mxu0 0.0
  %107 = vmatpush1.msra.mxu0 0.0
  %108 = vmatprep.subr.mxu0 0.0
  %109 = vmatpush1.msra.mxu0 0.0
  %110 = vmatprep.mubr.f32.mxu0 0.0
  %v111 = vand.u32 %v43, 4294901760
  %v112 = vsub.f32 %v43, %v111
  %v113 = vand.u32 %v112, 4294901760
  %v114 = vsub.f32 %v112, %v113
  %v115 = vand.u32 %v114, 4294901760
  %116 = vmatmul.mubr.f32.gmra.mrb[0].mxu0 %v115
  %v117 = vpop.f32.mrb[0].mxu0
  %v118 = vadd.f32 %v39, %v117
  %v119 = vpop.f32.mrb[0].mxu0
  %120 = vdwg.mxu0
  %121 = vmatprep.subr.mxu0 0.0
  %v122 = vand.u32 %v33, 4294901760
  %v123 = vsub.f32 %v33, %v122
  %v124 = vand.u32 %v123, 4294901760
  %v125 = vsub.f32 %v123, %v124
  %v126 = vand.u32 %v125, 4294901760
  %127 = vmatpush1.msra.mxu0 %v126
  %128 = vmatprep.subr.mxu0 0.0
  %129 = vmatpush1.msra.mxu0 0.0
  %130 = vmatprep.subr.mxu0 0.0
  %131 = vmatpush1.msra.mxu0 0.0
  %132 = vmatprep.subr.mxu0 0.0
  %133 = vmatpush1.msra.mxu0 0.0
  %134 = vmatprep.subr.mxu0 0.0
  %135 = vmatpush1.msra.mxu0 0.0
  %136 = vmatprep.subr.mxu0 0.0
  %137 = vmatpush1.msra.mxu0 0.0
  %138 = vmatprep.subr.mxu0 0.0
  %139 = vmatpush1.msra.mxu0 0.0
  %140 = vmatprep.subr.mxu0 0.0
  %141 = vmatpush1.msra.mxu0 0.0
  %142 = vmatprep.subr.mxu0 0.0
  %143 = vmatpush1.msra.mxu0 0.0
  %144 = vmatprep.subr.mxu0 0.0
  %145 = vmatpush1.msra.mxu0 0.0
  %146 = vmatprep.subr.mxu0 0.0
  %147 = vmatpush1.msra.mxu0 0.0
  %148 = vmatprep.subr.mxu0 0.0
  %149 = vmatpush1.msra.mxu0 0.0
  %150 = vmatprep.subr.mxu0 0.0
  %151 = vmatpush1.msra.mxu0 0.0
  %152 = vmatprep.subr.mxu0 0.0
  %153 = vmatpush1.msra.mxu0 0.0
  %154 = vmatprep.subr.mxu0 0.0
  %155 = vmatpush1.msra.mxu0 0.0
  %156 = vmatprep.subr.mxu0 0.0
  %157 = vmatpush1.msra.mxu0 0.0
  %158 = vmatprep.subr.mxu0 0.0
  %159 = vmatpush1.msra.mxu0 0.0
  %160 = vmatprep.subr.mxu0 0.0
  %161 = vmatpush1.msra.mxu0 0.0
  %162 = vmatprep.subr.mxu0 0.0
  %163 = vmatpush1.msra.mxu0 0.0
  %164 = vmatprep.subr.mxu0 0.0
  %165 = vmatpush1.msra.mxu0 0.0
  %166 = vmatprep.subr.mxu0 0.0
  %167 = vmatpush1.msra.mxu0 0.0
  %168 = vmatprep.subr.mxu0 0.0
  %169 = vmatpush1.msra.mxu0 0.0
  %170 = vmatprep.subr.mxu0 0.0
  %171 = vmatpush1.msra.mxu0 0.0
  %172 = vmatprep.subr.mxu0 0.0
  %173 = vmatpush1.msra.mxu0 0.0
  %174 = vmatprep.subr.mxu0 0.0
  %175 = vmatpush1.msra.mxu0 0.0
  %176 = vmatprep.subr.mxu0 0.0
  %177 = vmatpush1.msra.mxu0 0.0
  %178 = vmatprep.subr.mxu0 0.0
  %179 = vmatpush1.msra.mxu0 0.0
  %180 = vmatprep.subr.mxu0 0.0
  %181 = vmatpush1.msra.mxu0 0.0
  %182 = vmatprep.subr.mxu0 0.0
  %183 = vmatpush1.msra.mxu0 0.0
  %184 = vmatprep.subr.mxu0 0.0
  %185 = vmatpush1.msra.mxu0 0.0
  %186 = vmatprep.subr.mxu0 0.0
  %187 = vmatpush1.msra.mxu0 0.0
  %188 = vmatprep.subr.mxu0 0.0
  %189 = vmatpush1.msra.mxu0 0.0
  %190 = vmatprep.mubr.f32.mxu0 0.0
  %v191 = vand.u32 %v43, 4294901760
  %192 = vmatmul.mubr.f32.gmra.mrb[0].mxu0 %v191
  %v193 = vpop.f32.mrb[0].mxu0
  %v194 = vadd.f32 %v118, %v193
  %v195 = vpop.f32.mrb[0].mxu0
  %196 = vdwg.mxu0
  %197 = vmatprep.subr.mxu0 0.0
  %v198 = vand.u32 %v33, 4294901760
  %v199 = vsub.f32 %v33, %v198
  %200 = vmatpush1.msra.mxu0 %v199
  %201 = vmatprep.subr.mxu0 0.0
  %202 = vmatpush1.msra.mxu0 0.0
  %203 = vmatprep.subr.mxu0 0.0
  %204 = vmatpush1.msra.mxu0 0.0
  %205 = vmatprep.subr.mxu0 0.0
  %206 = vmatpush1.msra.mxu0 0.0
  %207 = vmatprep.subr.mxu0 0.0
  %208 = vmatpush1.msra.mxu0 0.0
  %209 = vmatprep.subr.mxu0 0.0
  %210 = vmatpush1.msra.mxu0 0.0
  %211 = vmatprep.subr.mxu0 0.0
  %212 = vmatpush1.msra.mxu0 0.0
  %213 = vmatprep.subr.mxu0 0.0
  %214 = vmatpush1.msra.mxu0 0.0
  %215 = vmatprep.subr.mxu0 0.0
  %216 = vmatpush1.msra.mxu0 0.0
  %217 = vmatprep.subr.mxu0 0.0
  %218 = vmatpush1.msra.mxu0 0.0
  %219 = vmatprep.subr.mxu0 0.0
  %220 = vmatpush1.msra.mxu0 0.0
  %221 = vmatprep.subr.mxu0 0.0
  %222 = vmatpush1.msra.mxu0 0.0
  %223 = vmatprep.subr.mxu0 0.0
  %224 = vmatpush1.msra.mxu0 0.0
  %225 = vmatprep.subr.mxu0 0.0
  %226 = vmatpush1.msra.mxu0 0.0
  %227 = vmatprep.subr.mxu0 0.0
  %228 = vmatpush1.msra.mxu0 0.0
  %229 = vmatprep.subr.mxu0 0.0
  %230 = vmatpush1.msra.mxu0 0.0
  %231 = vmatprep.subr.mxu0 0.0
  %232 = vmatpush1.msra.mxu0 0.0
  %233 = vmatprep.subr.mxu0 0.0
  %234 = vmatpush1.msra.mxu0 0.0
  %235 = vmatprep.subr.mxu0 0.0
  %236 = vmatpush1.msra.mxu0 0.0
  %237 = vmatprep.subr.mxu0 0.0
  %238 = vmatpush1.msra.mxu0 0.0
  %239 = vmatprep.subr.mxu0 0.0
  %240 = vmatpush1.msra.mxu0 0.0
  %241 = vmatprep.subr.mxu0 0.0
  %242 = vmatpush1.msra.mxu0 0.0
  %243 = vmatprep.subr.mxu0 0.0
  %244 = vmatpush1.msra.mxu0 0.0
  %245 = vmatprep.subr.mxu0 0.0
  %246 = vmatpush1.msra.mxu0 0.0
  %247 = vmatprep.subr.mxu0 0.0
  %248 = vmatpush1.msra.mxu0 0.0
  %249 = vmatprep.subr.mxu0 0.0
  %250 = vmatpush1.msra.mxu0 0.0
  %251 = vmatprep.subr.mxu0 0.0
  %252 = vmatpush1.msra.mxu0 0.0
  %253 = vmatprep.subr.mxu0 0.0
  %254 = vmatpush1.msra.mxu0 0.0
  %255 = vmatprep.subr.mxu0 0.0
  %256 = vmatpush1.msra.mxu0 0.0
  %257 = vmatprep.subr.mxu0 0.0
  %258 = vmatpush1.msra.mxu0 0.0
  %259 = vmatprep.subr.mxu0 0.0
  %260 = vmatpush1.msra.mxu0 0.0
  %261 = vmatprep.subr.mxu0 0.0
  %262 = vmatpush1.msra.mxu0 0.0
  %263 = vmatprep.mubr.f32.mxu0 0.0
  %v264 = vand.u32 %v43, 4294901760
  %v265 = vsub.f32 %v43, %v264
  %266 = vmatmul.mubr.f32.gmra.mrb[0].mxu0 %v265
  %v267 = vpop.f32.mrb[0].mxu0
  %v268 = vadd.f32 %v194, %v267
  %v269 = vpop.f32.mrb[0].mxu0
  %270 = vdwg.mxu0
  %271 = vmatprep.subr.mxu0 0.0
  %v272 = vand.u32 %v33, 4294901760
  %273 = vmatpush1.msra.mxu0 %v272
  %274 = vmatprep.subr.mxu0 0.0
  %275 = vmatpush1.msra.mxu0 0.0
  %276 = vmatprep.subr.mxu0 0.0
  %277 = vmatpush1.msra.mxu0 0.0
  %278 = vmatprep.subr.mxu0 0.0
  %279 = vmatpush1.msra.mxu0 0.0
  %280 = vmatprep.subr.mxu0 0.0
  %281 = vmatpush1.msra.mxu0 0.0
  %282 = vmatprep.subr.mxu0 0.0
  %283 = vmatpush1.msra.mxu0 0.0
  %284 = vmatprep.subr.mxu0 0.0
  %285 = vmatpush1.msra.mxu0 0.0
  %286 = vmatprep.subr.mxu0 0.0
  %287 = vmatpush1.msra.mxu0 0.0
  %288 = vmatprep.subr.mxu0 0.0
  %289 = vmatpush1.msra.mxu0 0.0
  %290 = vmatprep.subr.mxu0 0.0
  %291 = vmatpush1.msra.mxu0 0.0
  %292 = vmatprep.subr.mxu0 0.0
  %293 = vmatpush1.msra.mxu0 0.0
  %294 = vmatprep.subr.mxu0 0.0
  %295 = vmatpush1.msra.mxu0 0.0
  %296 = vmatprep.subr.mxu0 0.0
  %297 = vmatpush1.msra.mxu0 0.0
  %298 = vmatprep.subr.mxu0 0.0
  %299 = vmatpush1.msra.mxu0 0.0
  %300 = vmatprep.subr.mxu0 0.0
  %301 = vmatpush1.msra.mxu0 0.0
  %302 = vmatprep.subr.mxu0 0.0
  %303 = vmatpush1.msra.mxu0 0.0
  %304 = vmatprep.subr.mxu0 0.0
  %305 = vmatpush1.msra.mxu0 0.0
  %306 = vmatprep.subr.mxu0 0.0
  %307 = vmatpush1.msra.mxu0 0.0
  %308 = vmatprep.subr.mxu0 0.0
  %309 = vmatpush1.msra.mxu0 0.0
  %310 = vmatprep.subr.mxu0 0.0
  %311 = vmatpush1.msra.mxu0 0.0
  %312 = vmatprep.subr.mxu0 0.0
  %313 = vmatpush1.msra.mxu0 0.0
  %314 = vmatprep.subr.mxu0 0.0
  %315 = vmatpush1.msra.mxu0 0.0
  %316 = vmatprep.subr.mxu0 0.0
  %317 = vmatpush1.msra.mxu0 0.0
  %318 = vmatprep.subr.mxu0 0.0
  %319 = vmatpush1.msra.mxu0 0.0
  %320 = vmatprep.subr.mxu0 0.0
  %321 = vmatpush1.msra.mxu0 0.0
  %322 = vmatprep.subr.mxu0 0.0
  %323 = vmatpush1.msra.mxu0 0.0
  %324 = vmatprep.subr.mxu0 0.0
  %325 = vmatpush1.msra.mxu0 0.0
  %326 = vmatprep.subr.mxu0 0.0
  %327 = vmatpush1.msra.mxu0 0.0
  %328 = vmatprep.subr.mxu0 0.0
  %329 = vmatpush1.msra.mxu0 0.0
  %330 = vmatprep.subr.mxu0 0.0
  %331 = vmatpush1.msra.mxu0 0.0
  %332 = vmatprep.subr.mxu0 0.0
  %333 = vmatpush1.msra.mxu0 0.0
  %334 = vmatprep.subr.mxu0 0.0
  %335 = vmatpush1.msra.mxu0 0.0
  %336 = vmatprep.mubr.f32.mxu0 0.0
  %v337 = vand.u32 %v43, 4294901760
  %v338 = vsub.f32 %v43, %v337
  %v339 = vand.u32 %v338, 4294901760
  %340 = vmatmul.mubr.f32.gmra.mrb[0].mxu0 %v339
  %v341 = vpop.f32.mrb[0].mxu0
  %v342 = vadd.f32 %v268, %v341
  %v343 = vpop.f32.mrb[0].mxu0
  %344 = vdwg.mxu0
  %345 = vmatprep.subr.mxu0 0.0
  %v346 = vand.u32 %v33, 4294901760
  %v347 = vsub.f32 %v33, %v346
  %v348 = vand.u32 %v347, 4294901760
  %349 = vmatpush1.msra.mxu0 %v348
  %350 = vmatprep.subr.mxu0 0.0
  %351 = vmatpush1.msra.mxu0 0.0
  %352 = vmatprep.subr.mxu0 0.0
  %353 = vmatpush1.msra.mxu0 0.0
  %354 = vmatprep.subr.mxu0 0.0
  %355 = vmatpush1.msra.mxu0 0.0
  %356 = vmatprep.subr.mxu0 0.0
  %357 = vmatpush1.msra.mxu0 0.0
  %358 = vmatprep.subr.mxu0 0.0
  %359 = vmatpush1.msra.mxu0 0.0
  %360 = vmatprep.subr.mxu0 0.0
  %361 = vmatpush1.msra.mxu0 0.0
  %362 = vmatprep.subr.mxu0 0.0
  %363 = vmatpush1.msra.mxu0 0.0
  %364 = vmatprep.subr.mxu0 0.0
  %365 = vmatpush1.msra.mxu0 0.0
  %366 = vmatprep.subr.mxu0 0.0
  %367 = vmatpush1.msra.mxu0 0.0
  %368 = vmatprep.subr.mxu0 0.0
  %369 = vmatpush1.msra.mxu0 0.0
  %370 = vmatprep.subr.mxu0 0.0
  %371 = vmatpush1.msra.mxu0 0.0
  %372 = vmatprep.subr.mxu0 0.0
  %373 = vmatpush1.msra.mxu0 0.0
  %374 = vmatprep.subr.mxu0 0.0
  %375 = vmatpush1.msra.mxu0 0.0
  %376 = vmatprep.subr.mxu0 0.0
  %377 = vmatpush1.msra.mxu0 0.0
  %378 = vmatprep.subr.mxu0 0.0
  %379 = vmatpush1.msra.mxu0 0.0
  %380 = vmatprep.subr.mxu0 0.0
  %381 = vmatpush1.msra.mxu0 0.0
  %382 = vmatprep.subr.mxu0 0.0
  %383 = vmatpush1.msra.mxu0 0.0
  %384 = vmatprep.subr.mxu0 0.0
  %385 = vmatpush1.msra.mxu0 0.0
  %386 = vmatprep.subr.mxu0 0.0
  %387 = vmatpush1.msra.mxu0 0.0
  %388 = vmatprep.subr.mxu0 0.0
  %389 = vmatpush1.msra.mxu0 0.0
  %390 = vmatprep.subr.mxu0 0.0
  %391 = vmatpush1.msra.mxu0 0.0
  %392 = vmatprep.subr.mxu0 0.0
  %393 = vmatpush1.msra.mxu0 0.0
  %394 = vmatprep.subr.mxu0 0.0
  %395 = vmatpush1.msra.mxu0 0.0
  %396 = vmatprep.subr.mxu0 0.0
  %397 = vmatpush1.msra.mxu0 0.0
  %398 = vmatprep.subr.mxu0 0.0
  %399 = vmatpush1.msra.mxu0 0.0
  %400 = vmatprep.subr.mxu0 0.0
  %401 = vmatpush1.msra.mxu0 0.0
  %402 = vmatprep.subr.mxu0 0.0
  %403 = vmatpush1.msra.mxu0 0.0
  %404 = vmatprep.subr.mxu0 0.0
  %405 = vmatpush1.msra.mxu0 0.0
  %406 = vmatprep.subr.mxu0 0.0
  %407 = vmatpush1.msra.mxu0 0.0
  %408 = vmatprep.subr.mxu0 0.0
  %409 = vmatpush1.msra.mxu0 0.0
  %410 = vmatprep.subr.mxu0 0.0
  %411 = vmatpush1.msra.mxu0 0.0
  %412 = vmatprep.mubr.f32.mxu0 0.0
  %v413 = vand.u32 %v43, 4294901760
  %414 = vmatmul.mubr.f32.gmra.mrb[0].mxu0 %v413
  %v415 = vpop.f32.mrb[0].mxu0
  %v416 = vadd.f32 %v342, %v415
  %v417 = vpop.f32.mrb[0].mxu0
  %418 = vdwg.mxu0
  %419 = vmatprep.subr.mxu0 0.0
  %v420 = vand.u32 %v33, 4294901760
  %421 = vmatpush1.msra.mxu0 %v420
  %422 = vmatprep.subr.mxu0 0.0
  %423 = vmatpush1.msra.mxu0 0.0
  %424 = vmatprep.subr.mxu0 0.0
  %425 = vmatpush1.msra.mxu0 0.0
  %426 = vmatprep.subr.mxu0 0.0
  %427 = vmatpush1.msra.mxu0 0.0
  %428 = vmatprep.subr.mxu0 0.0
  %429 = vmatpush1.msra.mxu0 0.0
  %430 = vmatprep.subr.mxu0 0.0
  %431 = vmatpush1.msra.mxu0 0.0
  %432 = vmatprep.subr.mxu0 0.0
  %433 = vmatpush1.msra.mxu0 0.0
  %434 = vmatprep.subr.mxu0 0.0
  %435 = vmatpush1.msra.mxu0 0.0
  %436 = vmatprep.subr.mxu0 0.0
  %437 = vmatpush1.msra.mxu0 0.0
  %438 = vmatprep.subr.mxu0 0.0
  %439 = vmatpush1.msra.mxu0 0.0
  %440 = vmatprep.subr.mxu0 0.0
  %441 = vmatpush1.msra.mxu0 0.0
  %442 = vmatprep.subr.mxu0 0.0
  %443 = vmatpush1.msra.mxu0 0.0
  %444 = vmatprep.subr.mxu0 0.0
  %445 = vmatpush1.msra.mxu0 0.0
  %446 = vmatprep.subr.mxu0 0.0
  %447 = vmatpush1.msra.mxu0 0.0
  %448 = vmatprep.subr.mxu0 0.0
  %449 = vmatpush1.msra.mxu0 0.0
  %450 = vmatprep.subr.mxu0 0.0
  %451 = vmatpush1.msra.mxu0 0.0
  %452 = vmatprep.subr.mxu0 0.0
  %453 = vmatpush1.msra.mxu0 0.0
  %454 = vmatprep.subr.mxu0 0.0
  %455 = vmatpush1.msra.mxu0 0.0
  %456 = vmatprep.subr.mxu0 0.0
  %457 = vmatpush1.msra.mxu0 0.0
  %458 = vmatprep.subr.mxu0 0.0
  %459 = vmatpush1.msra.mxu0 0.0
  %460 = vmatprep.subr.mxu0 0.0
  %461 = vmatpush1.msra.mxu0 0.0
  %462 = vmatprep.subr.mxu0 0.0
  %463 = vmatpush1.msra.mxu0 0.0
  %464 = vmatprep.subr.mxu0 0.0
  %465 = vmatpush1.msra.mxu0 0.0
  %466 = vmatprep.subr.mxu0 0.0
  %467 = vmatpush1.msra.mxu0 0.0
  %468 = vmatprep.subr.mxu0 0.0
  %469 = vmatpush1.msra.mxu0 0.0
  %470 = vmatprep.subr.mxu0 0.0
  %471 = vmatpush1.msra.mxu0 0.0
  %472 = vmatprep.subr.mxu0 0.0
  %473 = vmatpush1.msra.mxu0 0.0
  %474 = vmatprep.subr.mxu0 0.0
  %475 = vmatpush1.msra.mxu0 0.0
  %476 = vmatprep.subr.mxu0 0.0
  %477 = vmatpush1.msra.mxu0 0.0
  %478 = vmatprep.subr.mxu0 0.0
  %479 = vmatpush1.msra.mxu0 0.0
  %480 = vmatprep.subr.mxu0 0.0
  %481 = vmatpush1.msra.mxu0 0.0
  %482 = vmatprep.subr.mxu0 0.0
  %483 = vmatpush1.msra.mxu0 0.0
  %484 = vmatprep.mubr.f32.mxu0 0.0
  %v485 = vand.u32 %v43, 4294901760
  %486 = vmatmul.mubr.f32.gmra.mrb[0].mxu0 %v485
  %v487 = vpop.f32.mrb[0].mxu0
  %v488 = vadd.f32 %v416, %v487
  %v489 = vpop.f32.mrb[0].mxu0
  %490 = vdwg.mxu0
  %v491 = vmul.f32 %v488, 0.01
  %v492 = vmax.f32 %v488, %v491
  %v493 = vld [vmem:[%s3] sm:$0xff]
  %v494 = vld [vmem:[%s3 + $0x8] sm:$0xff]
  %v495 = vld [vmem:[%s4] sm:$0x1]
  %v497 = vlaneseq
  %v498 = vshrl.u32 %v497, 7
  %v499 = vsub.s32 0, %v498
  %v500 = vrot.slane %v495, %v499
  %vm502 = vcmask 130048
  %v504 = vsel %vm502, %v492, 0
  %506 = vmatprep.subr.mxu0 0.0
  %v507 = vand.u32 %v493, 4294901760
  %508 = vmatpush1.msra.mxu0 %v507
  %509 = vmatprep.subr.mxu0 0.0
  %v510 = vand.u32 %v494, 4294901760
  %511 = vmatpush1.msra.mxu0 %v510
  %512 = vmatprep.subr.mxu0 0.0
  %513 = vmatpush1.msra.mxu0 0.0
  %514 = vmatprep.subr.mxu0 0.0
  %515 = vmatpush1.msra.mxu0 0.0
  %516 = vmatprep.subr.mxu0 0.0
  %517 = vmatpush1.msra.mxu0 0.0
  %518 = vmatprep.subr.mxu0 0.0
  %519 = vmatpush1.msra.mxu0 0.0
  %520 = vmatprep.subr.mxu0 0.0
  %521 = vmatpush1.msra.mxu0 0.0
  %522 = vmatprep.subr.mxu0 0.0
  %523 = vmatpush1.msra.mxu0 0.0
  %524 = vmatprep.subr.mxu0 0.0
  %525 = vmatpush1.msra.mxu0 0.0
  %526 = vmatprep.subr.mxu0 0.0
  %527 = vmatpush1.msra.mxu0 0.0
  %528 = vmatprep.subr.mxu0 0.0
  %529 = vmatpush1.msra.mxu0 0.0
  %530 = vmatprep.subr.mxu0 0.0
  %531 = vmatpush1.msra.mxu0 0.0
  %532 = vmatprep.subr.mxu0 0.0
  %533 = vmatpush1.msra.mxu0 0.0
  %534 = vmatprep.subr.mxu0 0.0
  %535 = vmatpush1.msra.mxu0 0.0
  %536 = vmatprep.subr.mxu0 0.0
  %537 = vmatpush1.msra.mxu0 0.0
  %538 = vmatprep.subr.mxu0 0.0
  %539 = vmatpush1.msra.mxu0 0.0
  %540 = vmatprep.subr.mxu0 0.0
  %541 = vmatpush1.msra.mxu0 0.0
  %542 = vmatprep.subr.mxu0 0.0
  %543 = vmatpush1.msra.mxu0 0.0
  %544 = vmatprep.subr.mxu0 0.0
  %545 = vmatpush1.msra.mxu0 0.0
  %546 = vmatprep.subr.mxu0 0.0
  %547 = vmatpush1.msra.mxu0 0.0
  %548 = vmatprep.subr.mxu0 0.0
  %549 = vmatpush1.msra.mxu0 0.0
  %550 = vmatprep.subr.mxu0 0.0
  %551 = vmatpush1.msra.mxu0 0.0
  %552 = vmatprep.subr.mxu0 0.0
  %553 = vmatpush1.msra.mxu0 0.0
  %554 = vmatprep.subr.mxu0 0.0
  %555 = vmatpush1.msra.mxu0 0.0
  %556 = vmatprep.subr.mxu0 0.0
  %557 = vmatpush1.msra.mxu0 0.0
  %558 = vmatprep.subr.mxu0 0.0
  %559 = vmatpush1.msra.mxu0 0.0
  %560 = vmatprep.subr.mxu0 0.0
  %561 = vmatpush1.msra.mxu0 0.0
  %562 = vmatprep.subr.mxu0 0.0
  %563 = vmatpush1.msra.mxu0 0.0
  %564 = vmatprep.subr.mxu0 0.0
  %565 = vmatpush1.msra.mxu0 0.0
  %566 = vmatprep.subr.mxu0 0.0
  %567 = vmatpush1.msra.mxu0 0.0
  %568 = vmatprep.subr.mxu0 0.0
  %569 = vmatpush1.msra.mxu0 0.0
  %570 = vmatprep.subr.mxu0 0.0
  %571 = vmatpush1.msra.mxu0 0.0
  %572 = vmatprep.mubr.f32.mxu0 0.0
  %v573 = vand.u32 %v504, 4294901760
  %v574 = vsub.f32 %v504, %v573
  %v575 = vand.u32 %v574, 4294901760
  %v576 = vsub.f32 %v574, %v575
  %v577 = vand.u32 %v576, 4294901760
  %578 = vmatmul.mubr.f32.gmra.mrb[0].mxu0 %v577
  %v579 = vpop.f32.mrb[0].mxu0
  %v580 = vadd.f32 %v500, %v579
  %v581 = vpop.f32.mrb[0].mxu0
  %582 = vdwg.mxu0
  %583 = vmatprep.subr.mxu0 0.0
  %v584 = vand.u32 %v493, 4294901760
  %v585 = vsub.f32 %v493, %v584
  %v586 = vand.u32 %v585, 4294901760
  %v587 = vsub.f32 %v585, %v586
  %v588 = vand.u32 %v587, 4294901760
  %589 = vmatpush1.msra.mxu0 %v588
  %590 = vmatprep.subr.mxu0 0.0
  %v591 = vand.u32 %v494, 4294901760
  %v592 = vsub.f32 %v494, %v591
  %v593 = vand.u32 %v592, 4294901760
  %v594 = vsub.f32 %v592, %v593
  %v595 = vand.u32 %v594, 4294901760
  %596 = vmatpush1.msra.mxu0 %v595
  %597 = vmatprep.subr.mxu0 0.0
  %598 = vmatpush1.msra.mxu0 0.0
  %599 = vmatprep.subr.mxu0 0.0
  %600 = vmatpush1.msra.mxu0 0.0
  %601 = vmatprep.subr.mxu0 0.0
  %602 = vmatpush1.msra.mxu0 0.0
  %603 = vmatprep.subr.mxu0 0.0
  %604 = vmatpush1.msra.mxu0 0.0
  %605 = vmatprep.subr.mxu0 0.0
  %606 = vmatpush1.msra.mxu0 0.0
  %607 = vmatprep.subr.mxu0 0.0
  %608 = vmatpush1.msra.mxu0 0.0
  %609 = vmatprep.subr.mxu0 0.0
  %610 = vmatpush1.msra.mxu0 0.0
  %611 = vmatprep.subr.mxu0 0.0
  %612 = vmatpush1.msra.mxu0 0.0
  %613 = vmatprep.subr.mxu0 0.0
  %614 = vmatpush1.msra.mxu0 0.0
  %615 = vmatprep.subr.mxu0 0.0
  %616 = vmatpush1.msra.mxu0 0.0
  %617 = vmatprep.subr.mxu0 0.0
  %618 = vmatpush1.msra.mxu0 0.0
  %619 = vmatprep.subr.mxu0 0.0
  %620 = vmatpush1.msra.mxu0 0.0
  %621 = vmatprep.subr.mxu0 0.0
  %622 = vmatpush1.msra.mxu0 0.0
  %623 = vmatprep.subr.mxu0 0.0
  %624 = vmatpush1.msra.mxu0 0.0
  %625 = vmatprep.subr.mxu0 0.0
  %626 = vmatpush1.msra.mxu0 0.0
  %627 = vmatprep.subr.mxu0 0.0
  %628 = vmatpush1.msra.mxu0 0.0
  %629 = vmatprep.subr.mxu0 0.0
  %630 = vmatpush1.msra.mxu0 0.0
  %631 = vmatprep.subr.mxu0 0.0
  %632 = vmatpush1.msra.mxu0 0.0
  %633 = vmatprep.subr.mxu0 0.0
  %634 = vmatpush1.msra.mxu0 0.0
  %635 = vmatprep.subr.mxu0 0.0
  %636 = vmatpush1.msra.mxu0 0.0
  %637 = vmatprep.subr.mxu0 0.0
  %638 = vmatpush1.msra.mxu0 0.0
  %639 = vmatprep.subr.mxu0 0.0
  %640 = vmatpush1.msra.mxu0 0.0
  %641 = vmatprep.subr.mxu0 0.0
  %642 = vmatpush1.msra.mxu0 0.0
  %643 = vmatprep.subr.mxu0 0.0
  %644 = vmatpush1.msra.mxu0 0.0
  %645 = vmatprep.subr.mxu0 0.0
  %646 = vmatpush1.msra.mxu0 0.0
  %647 = vmatprep.subr.mxu0 0.0
  %648 = vmatpush1.msra.mxu0 0.0
  %649 = vmatprep.subr.mxu0 0.0
  %650 = vmatpush1.msra.mxu0 0.0
  %651 = vmatprep.subr.mxu0 0.0
  %652 = vmatpush1.msra.mxu0 0.0
  %653 = vmatprep.subr.mxu0 0.0
  %654 = vmatpush1.msra.mxu0 0.0
  %655 = vmatprep.subr.mxu0 0.0
  %656 = vmatpush1.msra.mxu0 0.0
  %657 = vmatprep.mubr.f32.mxu0 0.0
  %v658 = vand.u32 %v504, 4294901760
  %659 = vmatmul.mubr.f32.gmra.mrb[0].mxu0 %v658
  %v660 = vpop.f32.mrb[0].mxu0
  %v661 = vadd.f32 %v580, %v660
  %v662 = vpop.f32.mrb[0].mxu0
  %663 = vdwg.mxu0
  %664 = vmatprep.subr.mxu0 0.0
  %v665 = vand.u32 %v493, 4294901760
  %v666 = vsub.f32 %v493, %v665
  %667 = vmatpush1.msra.mxu0 %v666
  %668 = vmatprep.subr.mxu0 0.0
  %v669 = vand.u32 %v494, 4294901760
  %v670 = vsub.f32 %v494, %v669
  %671 = vmatpush1.msra.mxu0 %v670
  %672 = vmatprep.subr.mxu0 0.0
  %673 = vmatpush1.msra.mxu0 0.0
  %674 = vmatprep.subr.mxu0 0.0
  %675 = vmatpush1.msra.mxu0 0.0
  %676 = vmatprep.subr.mxu0 0.0
  %677 = vmatpush1.msra.mxu0 0.0
  %678 = vmatprep.subr.mxu0 0.0
  %679 = vmatpush1.msra.mxu0 0.0
  %680 = vmatprep.subr.mxu0 0.0
  %681 = vmatpush1.msra.mxu0 0.0
  %682 = vmatprep.subr.mxu0 0.0
  %683 = vmatpush1.msra.mxu0 0.0
  %684 = vmatprep.subr.mxu0 0.0
  %685 = vmatpush1.msra.mxu0 0.0
  %686 = vmatprep.subr.mxu0 0.0
  %687 = vmatpush1.msra.mxu0 0.0
  %688 = vmatprep.subr.mxu0 0.0
  %689 = vmatpush1.msra.mxu0 0.0
  %690 = vmatprep.subr.mxu0 0.0
  %691 = vmatpush1.msra.mxu0 0.0
  %692 = vmatprep.subr.mxu0 0.0
  %693 = vmatpush1.msra.mxu0 0.0
  %694 = vmatprep.subr.mxu0 0.0
  %695 = vmatpush1.msra.mxu0 0.0
  %696 = vmatprep.subr.mxu0 0.0
  %697 = vmatpush1.msra.mxu0 0.0
  %698 = vmatprep.subr.mxu0 0.0
  %699 = vmatpush1.msra.mxu0 0.0
  %700 = vmatprep.subr.mxu0 0.0
  %701 = vmatpush1.msra.mxu0 0.0
  %702 = vmatprep.subr.mxu0 0.0
  %703 = vmatpush1.msra.mxu0 0.0
  %704 = vmatprep.subr.mxu0 0.0
  %705 = vmatpush1.msra.mxu0 0.0
  %706 = vmatprep.subr.mxu0 0.0
  %707 = vmatpush1.msra.mxu0 0.0
  %708 = vmatprep.subr.mxu0 0.0
  %709 = vmatpush1.msra.mxu0 0.0
  %710 = vmatprep.subr.mxu0 0.0
  %711 = vmatpush1.msra.mxu0 0.0
  %712 = vmatprep.subr.mxu0 0.0
  %713 = vmatpush1.msra.mxu0 0.0
  %714 = vmatprep.subr.mxu0 0.0
  %715 = vmatpush1.msra.mxu0 0.0
  %716 = vmatprep.subr.mxu0 0.0
  %717 = vmatpush1.msra.mxu0 0.0
  %718 = vmatprep.subr.mxu0 0.0
  %719 = vmatpush1.msra.mxu0 0.0
  %720 = vmatprep.subr.mxu0 0.0
  %721 = vmatpush1.msra.mxu0 0.0
  %722 = vmatprep.subr.mxu0 0.0
  %723 = vmatpush1.msra.mxu0 0.0
  %724 = vmatprep.subr.mxu0 0.0
  %725 = vmatpush1.msra.mxu0 0.0
  %726 = vmatprep.subr.mxu0 0.0
  %727 = vmatpush1.msra.mxu0 0.0
  %728 = vmatprep.subr.mxu0 0.0
  %729 = vmatpush1.msra.mxu0 0.0
  %730 = vmatprep.subr.mxu0 0.0
  %731 = vmatpush1.msra.mxu0 0.0
  %732 = vmatprep.mubr.f32.mxu0 0.0
  %v733 = vand.u32 %v504, 4294901760
  %v734 = vsub.f32 %v504, %v733
  %735 = vmatmul.mubr.f32.gmra.mrb[0].mxu0 %v734
  %v736 = vpop.f32.mrb[0].mxu0
  %v737 = vadd.f32 %v661, %v736
  %v738 = vpop.f32.mrb[0].mxu0
  %739 = vdwg.mxu0
  %740 = vmatprep.subr.mxu0 0.0
  %v741 = vand.u32 %v493, 4294901760
  %742 = vmatpush1.msra.mxu0 %v741
  %743 = vmatprep.subr.mxu0 0.0
  %v744 = vand.u32 %v494, 4294901760
  %745 = vmatpush1.msra.mxu0 %v744
  %746 = vmatprep.subr.mxu0 0.0
  %747 = vmatpush1.msra.mxu0 0.0
  %748 = vmatprep.subr.mxu0 0.0
  %749 = vmatpush1.msra.mxu0 0.0
  %750 = vmatprep.subr.mxu0 0.0
  %751 = vmatpush1.msra.mxu0 0.0
  %752 = vmatprep.subr.mxu0 0.0
  %753 = vmatpush1.msra.mxu0 0.0
  %754 = vmatprep.subr.mxu0 0.0
  %755 = vmatpush1.msra.mxu0 0.0
  %756 = vmatprep.subr.mxu0 0.0
  %757 = vmatpush1.msra.mxu0 0.0
  %758 = vmatprep.subr.mxu0 0.0
  %759 = vmatpush1.msra.mxu0 0.0
  %760 = vmatprep.subr.mxu0 0.0
  %761 = vmatpush1.msra.mxu0 0.0
  %762 = vmatprep.subr.mxu0 0.0
  %763 = vmatpush1.msra.mxu0 0.0
  %764 = vmatprep.subr.mxu0 0.0
  %765 = vmatpush1.msra.mxu0 0.0
  %766 = vmatprep.subr.mxu0 0.0
  %767 = vmatpush1.msra.mxu0 0.0
  %768 = vmatprep.subr.mxu0 0.0
  %769 = vmatpush1.msra.mxu0 0.0
  %770 = vmatprep.subr.mxu0 0.0
  %771 = vmatpush1.msra.mxu0 0.0
  %772 = vmatprep.subr.mxu0 0.0
  %773 = vmatpush1.msra.mxu0 0.0
  %774 = vmatprep.subr.mxu0 0.0
  %775 = vmatpush1.msra.mxu0 0.0
  %776 = vmatprep.subr.mxu0 0.0
  %777 = vmatpush1.msra.mxu0 0.0
  %778 = vmatprep.subr.mxu0 0.0
  %779 = vmatpush1.msra.mxu0 0.0
  %780 = vmatprep.subr.mxu0 0.0
  %781 = vmatpush1.msra.mxu0 0.0
  %782 = vmatprep.subr.mxu0 0.0
  %783 = vmatpush1.msra.mxu0 0.0
  %784 = vmatprep.subr.mxu0 0.0
  %785 = vmatpush1.msra.mxu0 0.0
  %786 = vmatprep.subr.mxu0 0.0
  %787 = vmatpush1.msra.mxu0 0.0
  %788 = vmatprep.subr.mxu0 0.0
  %789 = vmatpush1.msra.mxu0 0.0
  %790 = vmatprep.subr.mxu0 0.0
  %791 = vmatpush1.msra.mxu0 0.0
  %792 = vmatprep.subr.mxu0 0.0
  %793 = vmatpush1.msra.mxu0 0.0
  %794 = vmatprep.subr.mxu0 0.0
  %795 = vmatpush1.msra.mxu0 0.0
  %796 = vmatprep.subr.mxu0 0.0
  %797 = vmatpush1.msra.mxu0 0.0
  %798 = vmatprep.subr.mxu0 0.0
  %799 = vmatpush1.msra.mxu0 0.0
  %800 = vmatprep.subr.mxu0 0.0
  %801 = vmatpush1.msra.mxu0 0.0
  %802 = vmatprep.subr.mxu0 0.0
  %803 = vmatpush1.msra.mxu0 0.0
  %804 = vmatprep.subr.mxu0 0.0
  %805 = vmatpush1.msra.mxu0 0.0
  %806 = vmatprep.mubr.f32.mxu0 0.0
  %v807 = vand.u32 %v504, 4294901760
  %v808 = vsub.f32 %v504, %v807
  %v809 = vand.u32 %v808, 4294901760
  %810 = vmatmul.mubr.f32.gmra.mrb[0].mxu0 %v809
  %v811 = vpop.f32.mrb[0].mxu0
  %v812 = vadd.f32 %v737, %v811
  %v813 = vpop.f32.mrb[0].mxu0
  %814 = vdwg.mxu0
  %815 = vmatprep.subr.mxu0 0.0
  %v816 = vand.u32 %v493, 4294901760
  %v817 = vsub.f32 %v493, %v816
  %v818 = vand.u32 %v817, 4294901760
  %819 = vmatpush1.msra.mxu0 %v818
  %820 = vmatprep.subr.mxu0 0.0
  %v821 = vand.u32 %v494, 4294901760
  %v822 = vsub.f32 %v494, %v821
  %v823 = vand.u32 %v822, 4294901760
  %824 = vmatpush1.msra.mxu0 %v823
  %825 = vmatprep.subr.mxu0 0.0
  %826 = vmatpush1.msra.mxu0 0.0
  %827 = vmatprep.subr.mxu0 0.0
  %828 = vmatpush1.msra.mxu0 0.0
  %829 = vmatprep.subr.mxu0 0.0
  %830 = vmatpush1.msra.mxu0 0.0
  %831 = vmatprep.subr.mxu0 0.0
  %832 = vmatpush1.msra.mxu0 0.0
  %833 = vmatprep.subr.mxu0 0.0
  %834 = vmatpush1.msra.mxu0 0.0
  %835 = vmatprep.subr.mxu0 0.0
  %836 = vmatpush1.msra.mxu0 0.0
  %837 = vmatprep.subr.mxu0 0.0
  %838 = vmatpush1.msra.mxu0 0.0
  %839 = vmatprep.subr.mxu0 0.0
  %840 = vmatpush1.msra.mxu0 0.0
  %841 = vmatprep.subr.mxu0 0.0
  %842 = vmatpush1.msra.mxu0 0.0
  %843 = vmatprep.subr.mxu0 0.0
  %844 = vmatpush1.msra.mxu0 0.0
  %845 = vmatprep.subr.mxu0 0.0
  %846 = vmatpush1.msra.mxu0 0.0
  %847 = vmatprep.subr.mxu0 0.0
  %848 = vmatpush1.msra.mxu0 0.0
  %849 = vmatprep.subr.mxu0 0.0
  %850 = vmatpush1.msra.mxu0 0.0
  %851 = vmatprep.subr.mxu0 0.0
  %852 = vmatpush1.msra.mxu0 0.0
  %853 = vmatprep.subr.mxu0 0.0
  %854 = vmatpush1.msra.mxu0 0.0
  %855 = vmatprep.subr.mxu0 0.0
  %856 = vmatpush1.msra.mxu0 0.0
  %857 = vmatprep.subr.mxu0 0.0
  %858 = vmatpush1.msra.mxu0 0.0
  %859 = vmatprep.subr.mxu0 0.0
  %860 = vmatpush1.msra.mxu0 0.0
  %861 = vmatprep.subr.mxu0 0.0
  %862 = vmatpush1.msra.mxu0 0.0
  %863 = vmatprep.subr.mxu0 0.0
  %864 = vmatpush1.msra.mxu0 0.0
  %865 = vmatprep.subr.mxu0 0.0
  %866 = vmatpush1.msra.mxu0 0.0
  %867 = vmatprep.subr.mxu0 0.0
  %868 = vmatpush1.msra.mxu0 0.0
  %869 = vmatprep.subr.mxu0 0.0
  %870 = vmatpush1.msra.mxu0 0.0
  %871 = vmatprep.subr.mxu0 0.0
  %872 = vmatpush1.msra.mxu0 0.0
  %873 = vmatprep.subr.mxu0 0.0
  %874 = vmatpush1.msra.mxu0 0.0
  %875 = vmatprep.subr.mxu0 0.0
  %876 = vmatpush1.msra.mxu0 0.0
  %877 = vmatprep.subr.mxu0 0.0
  %878 = vmatpush1.msra.mxu0 0.0
  %879 = vmatprep.subr.mxu0 0.0
  %880 = vmatpush1.msra.mxu0 0.0
  %881 = vmatprep.subr.mxu0 0.0
  %882 = vmatpush1.msra.mxu0 0.0
  %883 = vmatprep.subr.mxu0 0.0
  %884 = vmatpush1.msra.mxu0 0.0
  %885 = vmatprep.mubr.f32.mxu0 0.0
  %v886 = vand.u32 %v504, 4294901760
  %887 = vmatmul.mubr.f32.gmra.mrb[0].mxu0 %v886
  %v888 = vpop.f32.mrb[0].mxu0
  %v889 = vadd.f32 %v812, %v888
  %v890 = vpop.f32.mrb[0].mxu0
  %891 = vdwg.mxu0
  %892 = vmatprep.subr.mxu0 0.0
  %v893 = vand.u32 %v493, 4294901760
  %894 = vmatpush1.msra.mxu0 %v893
  %895 = vmatprep.subr.mxu0 0.0
  %v896 = vand.u32 %v494, 4294901760
  %897 = vmatpush1.msra.mxu0 %v896
  %898 = vmatprep.subr.mxu0 0.0
  %899 = vmatpush1.msra.mxu0 0.0
  %900 = vmatprep.subr.mxu0 0.0
  %901 = vmatpush1.msra.mxu0 0.0
  %902 = vmatprep.subr.mxu0 0.0
  %903 = vmatpush1.msra.mxu0 0.0
  %904 = vmatprep.subr.mxu0 0.0
  %905 = vmatpush1.msra.mxu0 0.0
  %906 = vmatprep.subr.mxu0 0.0
  %907 = vmatpush1.msra.mxu0 0.0
  %908 = vmatprep.subr.mxu0 0.0
  %909 = vmatpush1.msra.mxu0 0.0
  %910 = vmatprep.subr.mxu0 0.0
  %911 = vmatpush1.msra.mxu0 0.0
  %912 = vmatprep.subr.mxu0 0.0
  %913 = vmatpush1.msra.mxu0 0.0
  %914 = vmatprep.subr.mxu0 0.0
  %915 = vmatpush1.msra.mxu0 0.0
  %916 = vmatprep.subr.mxu0 0.0
  %917 = vmatpush1.msra.mxu0 0.0
  %918 = vmatprep.subr.mxu0 0.0
  %919 = vmatpush1.msra.mxu0 0.0
  %920 = vmatprep.subr.mxu0 0.0
  %921 = vmatpush1.msra.mxu0 0.0
  %922 = vmatprep.subr.mxu0 0.0
  %923 = vmatpush1.msra.mxu0 0.0
  %924 = vmatprep.subr.mxu0 0.0
  %925 = vmatpush1.msra.mxu0 0.0
  %926 = vmatprep.subr.mxu0 0.0
  %927 = vmatpush1.msra.mxu0 0.0
  %928 = vmatprep.subr.mxu0 0.0
  %929 = vmatpush1.msra.mxu0 0.0
  %930 = vmatprep.subr.mxu0 0.0
  %931 = vmatpush1.msra.mxu0 0.0
  %932 = vmatprep.subr.mxu0 0.0
  %933 = vmatpush1.msra.mxu0 0.0
  %934 = vmatprep.subr.mxu0 0.0
  %935 = vmatpush1.msra.mxu0 0.0
  %936 = vmatprep.subr.mxu0 0.0
  %937 = vmatpush1.msra.mxu0 0.0
  %938 = vmatprep.subr.mxu0 0.0
  %939 = vmatpush1.msra.mxu0 0.0
  %940 = vmatprep.subr.mxu0 0.0
  %941 = vmatpush1.msra.mxu0 0.0
  %942 = vmatprep.subr.mxu0 0.0
  %943 = vmatpush1.msra.mxu0 0.0
  %944 = vmatprep.subr.mxu0 0.0
  %945 = vmatpush1.msra.mxu0 0.0
  %946 = vmatprep.subr.mxu0 0.0
  %947 = vmatpush1.msra.mxu0 0.0
  %948 = vmatprep.subr.mxu0 0.0
  %949 = vmatpush1.msra.mxu0 0.0
  %950 = vmatprep.subr.mxu0 0.0
  %951 = vmatpush1.msra.mxu0 0.0
  %952 = vmatprep.subr.mxu0 0.0
  %953 = vmatpush1.msra.mxu0 0.0
  %954 = vmatprep.subr.mxu0 0.0
  %955 = vmatpush1.msra.mxu0 0.0
  %956 = vmatprep.subr.mxu0 0.0
  %957 = vmatpush1.msra.mxu0 0.0
  %958 = vmatprep.mubr.f32.mxu0 0.0
  %v959 = vand.u32 %v504, 4294901760
  %960 = vmatmul.mubr.f32.gmra.mrb[0].mxu0 %v959
  %v961 = vpop.f32.mrb[0].mxu0
  %v962 = vadd.f32 %v889, %v961
  %v963 = vpop.f32.mrb[0].mxu0
  %964 = vdwg.mxu0
  %v965 = vmul.f32 %v962, 0.01
  %v966 = vmax.f32 %v962, %v965
  %v967 = vld [vmem:[%s5] sm:$0xff]
  %v968 = vld [vmem:[%s5 + $0x8] sm:$0xff]
  %v969 = vld [vmem:[%s5 + $0x10] sm:$0xff]
  %v970 = vld [vmem:[%s5 + $0x18] sm:$0xff]
  %v971 = vld [vmem:[%s6] sm:$0x1]
  %v973 = vlaneseq
  %v974 = vshrl.u32 %v973, 7
  %v975 = vsub.s32 0, %v974
  %v976 = vrot.slane %v971, %v975
  %vm978 = vcmask 261120
  %v980 = vsel %vm978, %v966, 0
  %982 = vmatprep.subr.mxu0 0.0
  %v983 = vand.u32 %v967, 4294901760
  %984 = vmatpush1.msra.mxu0 %v983
  %985 = vmatprep.subr.mxu0 0.0
  %v986 = vand.u32 %v968, 4294901760
  %987 = vmatpush1.msra.mxu0 %v986
  %988 = vmatprep.subr.mxu0 0.0
  %v989 = vand.u32 %v969, 4294901760
  %990 = vmatpush1.msra.mxu0 %v989
  %991 = vmatprep.subr.mxu0 0.0
  %v992 = vand.u32 %v970, 4294901760
  %993 = vmatpush1.msra.mxu0 %v992
  %994 = vmatprep.subr.mxu0 0.0
  %995 = vmatpush1.msra.mxu0 0.0
  %996 = vmatprep.subr.mxu0 0.0
  %997 = vmatpush1.msra.mxu0 0.0
  %998 = vmatprep.subr.mxu0 0.0
  %999 = vmatpush1.msra.mxu0 0.0
  %1000 = vmatprep.subr.mxu0 0.0
  %1001 = vmatpush1.msra.mxu0 0.0
  %1002 = vmatprep.subr.mxu0 0.0
  %1003 = vmatpush1.msra.mxu0 0.0
  %1004 = vmatprep.subr.mxu0 0.0
  %1005 = vmatpush1.msra.mxu0 0.0
  %1006 = vmatprep.subr.mxu0 0.0
  %1007 = vmatpush1.msra.mxu0 0.0
  %1008 = vmatprep.subr.mxu0 0.0
  %1009 = vmatpush1.msra.mxu0 0.0
  %1010 = vmatprep.subr.mxu0 0.0
  %1011 = vmatpush1.msra.mxu0 0.0
  %1012 = vmatprep.subr.mxu0 0.0
  %1013 = vmatpush1.msra.mxu0 0.0
  %1014 = vmatprep.subr.mxu0 0.0
  %1015 = vmatpush1.msra.mxu0 0.0
  %1016 = vmatprep.subr.mxu0 0.0
  %1017 = vmatpush1.msra.mxu0 0.0
  %1018 = vmatprep.subr.mxu0 0.0
  %1019 = vmatpush1.msra.mxu0 0.0
  %1020 = vmatprep.subr.mxu0 0.0
  %1021 = vmatpush1.msra.mxu0 0.0
  %1022 = vmatprep.subr.mxu0 0.0
  %1023 = vmatpush1.msra.mxu0 0.0
  %1024 = vmatprep.subr.mxu0 0.0
  %1025 = vmatpush1.msra.mxu0 0.0
  %1026 = vmatprep.subr.mxu0 0.0
  %1027 = vmatpush1.msra.mxu0 0.0
  %1028 = vmatprep.subr.mxu0 0.0
  %1029 = vmatpush1.msra.mxu0 0.0
  %1030 = vmatprep.subr.mxu0 0.0
  %1031 = vmatpush1.msra.mxu0 0.0
  %1032 = vmatprep.subr.mxu0 0.0
  %1033 = vmatpush1.msra.mxu0 0.0
  %1034 = vmatprep.subr.mxu0 0.0
  %1035 = vmatpush1.msra.mxu0 0.0
  %1036 = vmatprep.subr.mxu0 0.0
  %1037 = vmatpush1.msra.mxu0 0.0
  %1038 = vmatprep.subr.mxu0 0.0
  %1039 = vmatpush1.msra.mxu0 0.0
  %1040 = vmatprep.subr.mxu0 0.0
  %1041 = vmatpush1.msra.mxu0 0.0
  %1042 = vmatprep.subr.mxu0 0.0
  %1043 = vmatpush1.msra.mxu0 0.0
  %1044 = vmatprep.subr.mxu0 0.0
  %1045 = vmatpush1.msra.mxu0 0.0
  %1046 = vmatprep.subr.mxu0 0.0
  %1047 = vmatpush1.msra.mxu0 0.0
  %1048 = vmatprep.subr.mxu0 0.0
  %1049 = vmatpush1.msra.mxu0 0.0
  %1050 = vmatprep.mubr.f32.mxu0 0.0
  %v1051 = vand.u32 %v980, 4294901760
  %v1052 = vsub.f32 %v980, %v1051
  %v1053 = vand.u32 %v1052, 4294901760
  %v1054 = vsub.f32 %v1052, %v1053
  %v1055 = vand.u32 %v1054, 4294901760
  %1056 = vmatmul.mubr.f32.gmra.mrb[0].mxu0 %v1055
  %v1057 = vpop.f32.mrb[0].mxu0
  %v1058 = vadd.f32 %v976, %v1057
  %v1059 = vpop.f32.mrb[0].mxu0
  %1060 = vdwg.mxu0
  %1061 = vmatprep.subr.mxu0 0.0
  %v1062 = vand.u32 %v967, 4294901760
  %v1063 = vsub.f32 %v967, %v1062
  %v1064 = vand.u32 %v1063, 4294901760
  %v1065 = vsub.f32 %v1063, %v1064
  %v1066 = vand.u32 %v1065, 4294901760
  %1067 = vmatpush1.msra.mxu0 %v1066
  %1068 = vmatprep.subr.mxu0 0.0
  %v1069 = vand.u32 %v968, 4294901760
  %v1070 = vsub.f32 %v968, %v1069
  %v1071 = vand.u32 %v1070, 4294901760
  %v1072 = vsub.f32 %v1070, %v1071
  %v1073 = vand.u32 %v1072, 4294901760
  %1074 = vmatpush1.msra.mxu0 %v1073
  %1075 = vmatprep.subr.mxu0 0.0
  %v1076 = vand.u32 %v969, 4294901760
  %v1077 = vsub.f32 %v969, %v1076
  %v1078 = vand.u32 %v1077, 4294901760
  %v1079 = vsub.f32 %v1077, %v1078
  %v1080 = vand.u32 %v1079, 4294901760
  %1081 = vmatpush1.msra.mxu0 %v1080
  %1082 = vmatprep.subr.mxu0 0.0
  %v1083 = vand.u32 %v970, 4294901760
  %v1084 = vsub.f32 %v970, %v1083
  %v1085 = vand.u32 %v1084, 4294901760
  %v1086 = vsub.f32 %v1084, %v1085
  %v1087 = vand.u32 %v1086, 4294901760
  %1088 = vmatpush1.msra.mxu0 %v1087
  %1089 = vmatprep.subr.mxu0 0.0
  %1090 = vmatpush1.msra.mxu0 0.0
  %1091 = vmatprep.subr.mxu0 0.0
  %1092 = vmatpush1.msra.mxu0 0.0
  %1093 = vmatprep.subr.mxu0 0.0
  %1094 = vmatpush1.msra.mxu0 0.0
  %1095 = vmatprep.subr.mxu0 0.0
  %1096 = vmatpush1.msra.mxu0 0.0
  %1097 = vmatprep.subr.mxu0 0.0
  %1098 = vmatpush1.msra.mxu0 0.0
  %1099 = vmatprep.subr.mxu0 0.0
  %1100 = vmatpush1.msra.mxu0 0.0
  %1101 = vmatprep.subr.mxu0 0.0
  %1102 = vmatpush1.msra.mxu0 0.0
  %1103 = vmatprep.subr.mxu0 0.0
  %1104 = vmatpush1.msra.mxu0 0.0
  %1105 = vmatprep.subr.mxu0 0.0
  %1106 = vmatpush1.msra.mxu0 0.0
  %1107 = vmatprep.subr.mxu0 0.0
  %1108 = vmatpush1.msra.mxu0 0.0
  %1109 = vmatprep.subr.mxu0 0.0
  %1110 = vmatpush1.msra.mxu0 0.0
  %1111 = vmatprep.subr.mxu0 0.0
  %1112 = vmatpush1.msra.mxu0 0.0
  %1113 = vmatprep.subr.mxu0 0.0
  %1114 = vmatpush1.msra.mxu0 0.0
  %1115 = vmatprep.subr.mxu0 0.0
  %1116 = vmatpush1.msra.mxu0 0.0
  %1117 = vmatprep.subr.mxu0 0.0
  %1118 = vmatpush1.msra.mxu0 0.0
  %1119 = vmatprep.subr.mxu0 0.0
  %1120 = vmatpush1.msra.mxu0 0.0
  %1121 = vmatprep.subr.mxu0 0.0
  %1122 = vmatpush1.msra.mxu0 0.0
  %1123 = vmatprep.subr.mxu0 0.0
  %1124 = vmatpush1.msra.mxu0 0.0
  %1125 = vmatprep.subr.mxu0 0.0
  %1126 = vmatpush1.msra.mxu0 0.0
  %1127 = vmatprep.subr.mxu0 0.0
  %1128 = vmatpush1.msra.mxu0 0.0
  %1129 = vmatprep.subr.mxu0 0.0
  %1130 = vmatpush1.msra.mxu0 0.0
  %1131 = vmatprep.subr.mxu0 0.0
  %1132 = vmatpush1.msra.mxu0 0.0
  %1133 = vmatprep.subr.mxu0 0.0
  %1134 = vmatpush1.msra.mxu0 0.0
  %1135 = vmatprep.subr.mxu0 0.0
  %1136 = vmatpush1.msra.mxu0 0.0
  %1137 = vmatprep.subr.mxu0 0.0
  %1138 = vmatpush1.msra.mxu0 0.0
  %1139 = vmatprep.subr.mxu0 0.0
  %1140 = vmatpush1.msra.mxu0 0.0
  %1141 = vmatprep.subr.mxu0 0.0
  %1142 = vmatpush1.msra.mxu0 0.0
  %1143 = vmatprep.subr.mxu0 0.0
  %1144 = vmatpush1.msra.mxu0 0.0
  %1145 = vmatprep.mubr.f32.mxu0 0.0
  %v1146 = vand.u32 %v980, 4294901760
  %1147 = vmatmul.mubr.f32.gmra.mrb[0].mxu0 %v1146
  %v1148 = vpop.f32.mrb[0].mxu0
  %v1149 = vadd.f32 %v1058, %v1148
  %v1150 = vpop.f32.mrb[0].mxu0
  %1151 = vdwg.mxu0
  %1152 = vmatprep.subr.mxu0 0.0
  %v1153 = vand.u32 %v967, 4294901760
  %v1154 = vsub.f32 %v967, %v1153
  %1155 = vmatpush1.msra.mxu0 %v1154
  %1156 = vmatprep.subr.mxu0 0.0
  %v1157 = vand.u32 %v968, 4294901760
  %v1158 = vsub.f32 %v968, %v1157
  %1159 = vmatpush1.msra.mxu0 %v1158
  %1160 = vmatprep.subr.mxu0 0.0
  %v1161 = vand.u32 %v969, 4294901760
  %v1162 = vsub.f32 %v969, %v1161
  %1163 = vmatpush1.msra.mxu0 %v1162
  %1164 = vmatprep.subr.mxu0 0.0
  %v1165 = vand.u32 %v970, 4294901760
  %v1166 = vsub.f32 %v970, %v1165
  %1167 = vmatpush1.msra.mxu0 %v1166
  %1168 = vmatprep.subr.mxu0 0.0
  %1169 = vmatpush1.msra.mxu0 0.0
  %1170 = vmatprep.subr.mxu0 0.0
  %1171 = vmatpush1.msra.mxu0 0.0
  %1172 = vmatprep.subr.mxu0 0.0
  %1173 = vmatpush1.msra.mxu0 0.0
  %1174 = vmatprep.subr.mxu0 0.0
  %1175 = vmatpush1.msra.mxu0 0.0
  %1176 = vmatprep.subr.mxu0 0.0
  %1177 = vmatpush1.msra.mxu0 0.0
  %1178 = vmatprep.subr.mxu0 0.0
  %1179 = vmatpush1.msra.mxu0 0.0
  %1180 = vmatprep.subr.mxu0 0.0
  %1181 = vmatpush1.msra.mxu0 0.0
  %1182 = vmatprep.subr.mxu0 0.0
  %1183 = vmatpush1.msra.mxu0 0.0
  %1184 = vmatprep.subr.mxu0 0.0
  %1185 = vmatpush1.msra.mxu0 0.0
  %1186 = vmatprep.subr.mxu0 0.0
  %1187 = vmatpush1.msra.mxu0 0.0
  %1188 = vmatprep.subr.mxu0 0.0
  %1189 = vmatpush1.msra.mxu0 0.0
  %1190 = vmatprep.subr.mxu0 0.0
  %1191 = vmatpush1.msra.mxu0 0.0
  %1192 = vmatprep.subr.mxu0 0.0
  %1193 = vmatpush1.msra.mxu0 0.0
  %1194 = vmatprep.subr.mxu0 0.0
  %1195 = vmatpush1.msra.mxu0 0.0
  %1196 = vmatprep.subr.mxu0 0.0
  %1197 = vmatpush1.msra.mxu0 0.0
  %1198 = vmatprep.subr.mxu0 0.0
  %1199 = vmatpush1.msra.mxu0 0.0
  %1200 = vmatprep.subr.mxu0 0.0
  %1201 = vmatpush1.msra.mxu0 0.0
  %1202 = vmatprep.subr.mxu0 0.0
  %1203 = vmatpush1.msra.mxu0 0.0
  %1204 = vmatprep.subr.mxu0 0.0
  %1205 = vmatpush1.msra.mxu0 0.0
  %1206 = vmatprep.subr.mxu0 0.0
  %1207 = vmatpush1.msra.mxu0 0.0
  %1208 = vmatprep.subr.mxu0 0.0
  %1209 = vmatpush1.msra.mxu0 0.0
  %1210 = vmatprep.subr.mxu0 0.0
  %1211 = vmatpush1.msra.mxu0 0.0
  %1212 = vmatprep.subr.mxu0 0.0
  %1213 = vmatpush1.msra.mxu0 0.0
  %1214 = vmatprep.subr.mxu0 0.0
  %1215 = vmatpush1.msra.mxu0 0.0
  %1216 = vmatprep.subr.mxu0 0.0
  %1217 = vmatpush1.msra.mxu0 0.0
  %1218 = vmatprep.subr.mxu0 0.0
  %1219 = vmatpush1.msra.mxu0 0.0
  %1220 = vmatprep.subr.mxu0 0.0
  %1221 = vmatpush1.msra.mxu0 0.0
  %1222 = vmatprep.subr.mxu0 0.0
  %1223 = vmatpush1.msra.mxu0 0.0
  %1224 = vmatprep.mubr.f32.mxu0 0.0
  %v1225 = vand.u32 %v980, 4294901760
  %v1226 = vsub.f32 %v980, %v1225
  %1227 = vmatmul.mubr.f32.gmra.mrb[0].mxu0 %v1226
  %v1228 = vpop.f32.mrb[0].mxu0
  %v1229 = vadd.f32 %v1149, %v1228
  %v1230 = vpop.f32.mrb[0].mxu0
  %1231 = vdwg.mxu0
  %1232 = vmatprep.subr.mxu0 0.0
  %v1233 = vand.u32 %v967, 4294901760
  %1234 = vmatpush1.msra.mxu0 %v1233
  %1235 = vmatprep.subr.mxu0 0.0
  %v1236 = vand.u32 %v968, 4294901760
  %1237 = vmatpush1.msra.mxu0 %v1236
  %1238 = vmatprep.subr.mxu0 0.0
  %v1239 = vand.u32 %v969, 4294901760
  %1240 = vmatpush1.msra.mxu0 %v1239
  %1241 = vmatprep.subr.mxu0 0.0
  %v1242 = vand.u32 %v970, 4294901760
  %1243 = vmatpush1.msra.mxu0 %v1242
  %1244 = vmatprep.subr.mxu0 0.0
  %1245 = vmatpush1.msra.mxu0 0.0
  %1246 = vmatprep.subr.mxu0 0.0
  %1247 = vmatpush1.msra.mxu0 0.0
  %1248 = vmatprep.subr.mxu0 0.0
  %1249 = vmatpush1.msra.mxu0 0.0
  %1250 = vmatprep.subr.mxu0 0.0
  %1251 = vmatpush1.msra.mxu0 0.0
  %1252 = vmatprep.subr.mxu0 0.0
  %1253 = vmatpush1.msra.mxu0 0.0
  %1254 = vmatprep.subr.mxu0 0.0
  %1255 = vmatpush1.msra.mxu0 0.0
  %1256 = vmatprep.subr.mxu0 0.0
  %1257 = vmatpush1.msra.mxu0 0.0
  %1258 = vmatprep.subr.mxu0 0.0
  %1259 = vmatpush1.msra.mxu0 0.0
  %1260 = vmatprep.subr.mxu0 0.0
  %1261 = vmatpush1.msra.mxu0 0.0
  %1262 = vmatprep.subr.mxu0 0.0
  %1263 = vmatpush1.msra.mxu0 0.0
  %1264 = vmatprep.subr.mxu0 0.0
  %1265 = vmatpush1.msra.mxu0 0.0
  %1266 = vmatprep.subr.mxu0 0.0
  %1267 = vmatpush1.msra.mxu0 0.0
  %1268 = vmatprep.subr.mxu0 0.0
  %1269 = vmatpush1.msra.mxu0 0.0
  %1270 = vmatprep.subr.mxu0 0.0
  %1271 = vmatpush1.msra.mxu0 0.0
  %1272 = vmatprep.subr.mxu0 0.0
  %1273 = vmatpush1.msra.mxu0 0.0
  %1274 = vmatprep.subr.mxu0 0.0
  %1275 = vmatpush1.msra.mxu0 0.0
  %1276 = vmatprep.subr.mxu0 0.0
  %1277 = vmatpush1.msra.mxu0 0.0
  %1278 = vmatprep.subr.mxu0 0.0
  %1279 = vmatpush1.msra.mxu0 0.0
  %1280 = vmatprep.subr.mxu0 0.0
  %1281 = vmatpush1.msra.mxu0 0.0
  %1282 = vmatprep.subr.mxu0 0.0
  %1283 = vmatpush1.msra.mxu0 0.0
  %1284 = vmatprep.subr.mxu0 0.0
  %1285 = vmatpush1.msra.mxu0 0.0
  %1286 = vmatprep.subr.mxu0 0.0
  %1287 = vmatpush1.msra.mxu0 0.0
  %1288 = vmatprep.subr.mxu0 0.0
  %1289 = vmatpush1.msra.mxu0 0.0
  %1290 = vmatprep.subr.mxu0 0.0
  %1291 = vmatpush1.msra.mxu0 0.0
  %1292 = vmatprep.subr.mxu0 0.0
  %1293 = vmatpush1.msra.mxu0 0.0
  %1294 = vmatprep.subr.mxu0 0.0
  %1295 = vmatpush1.msra.mxu0 0.0
  %1296 = vmatprep.subr.mxu0 0.0
  %1297 = vmatpush1.msra.mxu0 0.0
  %1298 = vmatprep.subr.mxu0 0.0
  %1299 = vmatpush1.msra.mxu0 0.0
  %1300 = vmatprep.mubr.f32.mxu0 0.0
  %v1301 = vand.u32 %v980, 4294901760
  %v1302 = vsub.f32 %v980, %v1301
  %v1303 = vand.u32 %v1302, 4294901760
  %1304 = vmatmul.mubr.f32.gmra.mrb[0].mxu0 %v1303
  %v1305 = vpop.f32.mrb[0].mxu0
  %v1306 = vadd.f32 %v1229, %v1305
  %v1307 = vpop.f32.mrb[0].mxu0
  %1308 = vdwg.mxu0
  %1309 = vmatprep.subr.mxu0 0.0
  %v1310 = vand.u32 %v967, 4294901760
  %v1311 = vsub.f32 %v967, %v1310
  %v1312 = vand.u32 %v1311, 4294901760
  %1313 = vmatpush1.msra.mxu0 %v1312
  %1314 = vmatprep.subr.mxu0 0.0
  %v1315 = vand.u32 %v968, 4294901760
  %v1316 = vsub.f32 %v968, %v1315
  %v1317 = vand.u32 %v1316, 4294901760
  %1318 = vmatpush1.msra.mxu0 %v1317
  %1319 = vmatprep.subr.mxu0 0.0
  %v1320 = vand.u32 %v969, 4294901760
  %v1321 = vsub.f32 %v969, %v1320
  %v1322 = vand.u32 %v1321, 4294901760
  %1323 = vmatpush1.msra.mxu0 %v1322
  %1324 = vmatprep.subr.mxu0 0.0
  %v1325 = vand.u32 %v970, 4294901760
  %v1326 = vsub.f32 %v970, %v1325
  %v1327 = vand.u32 %v1326, 4294901760
  %1328 = vmatpush1.msra.mxu0 %v1327
  %1329 = vmatprep.subr.mxu0 0.0
  %1330 = vmatpush1.msra.mxu0 0.0
  %1331 = vmatprep.subr.mxu0 0.0
  %1332 = vmatpush1.msra.mxu0 0.0
  %1333 = vmatprep.subr.mxu0 0.0
  %1334 = vmatpush1.msra.mxu0 0.0
  %1335 = vmatprep.subr.mxu0 0.0
  %1336 = vmatpush1.msra.mxu0 0.0
  %1337 = vmatprep.subr.mxu0 0.0
  %1338 = vmatpush1.msra.mxu0 0.0
  %1339 = vmatprep.subr.mxu0 0.0
  %1340 = vmatpush1.msra.mxu0 0.0
  %1341 = vmatprep.subr.mxu0 0.0
  %1342 = vmatpush1.msra.mxu0 0.0
  %1343 = vmatprep.subr.mxu0 0.0
  %1344 = vmatpush1.msra.mxu0 0.0
  %1345 = vmatprep.subr.mxu0 0.0
  %1346 = vmatpush1.msra.mxu0 0.0
  %1347 = vmatprep.subr.mxu0 0.0
  %1348 = vmatpush1.msra.mxu0 0.0
  %1349 = vmatprep.subr.mxu0 0.0
  %1350 = vmatpush1.msra.mxu0 0.0
  %1351 = vmatprep.subr.mxu0 0.0
  %1352 = vmatpush1.msra.mxu0 0.0
  %1353 = vmatprep.subr.mxu0 0.0
  %1354 = vmatpush1.msra.mxu0 0.0
  %1355 = vmatprep.subr.mxu0 0.0
  %1356 = vmatpush1.msra.mxu0 0.0
  %1357 = vmatprep.subr.mxu0 0.0
  %1358 = vmatpush1.msra.mxu0 0.0
  %1359 = vmatprep.subr.mxu0 0.0
  %1360 = vmatpush1.msra.mxu0 0.0
  %1361 = vmatprep.subr.mxu0 0.0
  %1362 = vmatpush1.msra.mxu0 0.0
  %1363 = vmatprep.subr.mxu0 0.0
  %1364 = vmatpush1.msra.mxu0 0.0
  %1365 = vmatprep.subr.mxu0 0.0
  %1366 = vmatpush1.msra.mxu0 0.0
  %1367 = vmatprep.subr.mxu0 0.0
  %1368 = vmatpush1.msra.mxu0 0.0
  %1369 = vmatprep.subr.mxu0 0.0
  %1370 = vmatpush1.msra.mxu0 0.0
  %1371 = vmatprep.subr.mxu0 0.0
  %1372 = vmatpush1.msra.mxu0 0.0
  %1373 = vmatprep.subr.mxu0 0.0
  %1374 = vmatpush1.msra.mxu0 0.0
  %1375 = vmatprep.subr.mxu0 0.0
  %1376 = vmatpush1.msra.mxu0 0.0
  %1377 = vmatprep.subr.mxu0 0.0
  %1378 = vmatpush1.msra.mxu0 0.0
  %1379 = vmatprep.subr.mxu0 0.0
  %1380 = vmatpush1.msra.mxu0 0.0
  %1381 = vmatprep.subr.mxu0 0.0
  %1382 = vmatpush1.msra.mxu0 0.0
  %1383 = vmatprep.subr.mxu0 0.0
  %1384 = vmatpush1.msra.mxu0 0.0
  %1385 = vmatprep.mubr.f32.mxu0 0.0
  %v1386 = vand.u32 %v980, 4294901760
  %1387 = vmatmul.mubr.f32.gmra.mrb[0].mxu0 %v1386
  %v1388 = vpop.f32.mrb[0].mxu0
  %v1389 = vadd.f32 %v1306, %v1388
  %v1390 = vpop.f32.mrb[0].mxu0
  %1391 = vdwg.mxu0
  %1392 = vmatprep.subr.mxu0 0.0
  %v1393 = vand.u32 %v967, 4294901760
  %1394 = vmatpush1.msra.mxu0 %v1393
  %1395 = vmatprep.subr.mxu0 0.0
  %v1396 = vand.u32 %v968, 4294901760
  %1397 = vmatpush1.msra.mxu0 %v1396
  %1398 = vmatprep.subr.mxu0 0.0
  %v1399 = vand.u32 %v969, 4294901760
  %1400 = vmatpush1.msra.mxu0 %v1399
  %1401 = vmatprep.subr.mxu0 0.0
  %v1402 = vand.u32 %v970, 4294901760
  %1403 = vmatpush1.msra.mxu0 %v1402
  %1404 = vmatprep.subr.mxu0 0.0
  %1405 = vmatpush1.msra.mxu0 0.0
  %1406 = vmatprep.subr.mxu0 0.0
  %1407 = vmatpush1.msra.mxu0 0.0
  %1408 = vmatprep.subr.mxu0 0.0
  %1409 = vmatpush1.msra.mxu0 0.0
  %1410 = vmatprep.subr.mxu0 0.0
  %1411 = vmatpush1.msra.mxu0 0.0
  %1412 = vmatprep.subr.mxu0 0.0
  %1413 = vmatpush1.msra.mxu0 0.0
  %1414 = vmatprep.subr.mxu0 0.0
  %1415 = vmatpush1.msra.mxu0 0.0
  %1416 = vmatprep.subr.mxu0 0.0
  %1417 = vmatpush1.msra.mxu0 0.0
  %1418 = vmatprep.subr.mxu0 0.0
  %1419 = vmatpush1.msra.mxu0 0.0
  %1420 = vmatprep.subr.mxu0 0.0
  %1421 = vmatpush1.msra.mxu0 0.0
  %1422 = vmatprep.subr.mxu0 0.0
  %1423 = vmatpush1.msra.mxu0 0.0
  %1424 = vmatprep.subr.mxu0 0.0
  %1425 = vmatpush1.msra.mxu0 0.0
  %1426 = vmatprep.subr.mxu0 0.0
  %1427 = vmatpush1.msra.mxu0 0.0
  %1428 = vmatprep.subr.mxu0 0.0
  %1429 = vmatpush1.msra.mxu0 0.0
  %1430 = vmatprep.subr.mxu0 0.0
  %1431 = vmatpush1.msra.mxu0 0.0
  %1432 = vmatprep.subr.mxu0 0.0
  %1433 = vmatpush1.msra.mxu0 0.0
  %1434 = vmatprep.subr.mxu0 0.0
  %1435 = vmatpush1.msra.mxu0 0.0
  %1436 = vmatprep.subr.mxu0 0.0
  %1437 = vmatpush1.msra.mxu0 0.0
  %1438 = vmatprep.subr.mxu0 0.0
  %1439 = vmatpush1.msra.mxu0 0.0
  %1440 = vmatprep.subr.mxu0 0.0
  %1441 = vmatpush1.msra.mxu0 0.0
  %1442 = vmatprep.subr.mxu0 0.0
  %1443 = vmatpush1.msra.mxu0 0.0
  %1444 = vmatprep.subr.mxu0 0.0
  %1445 = vmatpush1.msra.mxu0 0.0
  %1446 = vmatprep.subr.mxu0 0.0
  %1447 = vmatpush1.msra.mxu0 0.0
  %1448 = vmatprep.subr.mxu0 0.0
  %1449 = vmatpush1.msra.mxu0 0.0
  %1450 = vmatprep.subr.mxu0 0.0
  %1451 = vmatpush1.msra.mxu0 0.0
  %1452 = vmatprep.subr.mxu0 0.0
  %1453 = vmatpush1.msra.mxu0 0.0
  %1454 = vmatprep.subr.mxu0 0.0
  %1455 = vmatpush1.msra.mxu0 0.0
  %1456 = vmatprep.subr.mxu0 0.0
  %1457 = vmatpush1.msra.mxu0 0.0
  %1458 = vmatprep.subr.mxu0 0.0
  %1459 = vmatpush1.msra.mxu0 0.0
  %1460 = vmatprep.mubr.f32.mxu0 0.0
  %v1461 = vand.u32 %v980, 4294901760
  %1462 = vmatmul.mubr.f32.gmra.mrb[0].mxu0 %v1461
  %v1463 = vpop.f32.mrb[0].mxu0
  %v1464 = vadd.f32 %v1389, %v1463
  %v1465 = vpop.f32.mrb[0].mxu0
  %1466 = vdwg.mxu0
  %v1467 = vmul.f32 %v1464, 0.01
  %v1468 = vmax.f32 %v1464, %v1467
  %v1469 = vld [vmem:[%s7] sm:$0xff]
  %v1470 = vld [vmem:[%s7 + $0x8] sm:$0xff]
  %v1471 = vld [vmem:[%s7 + $0x10] sm:$0xff]
  %v1472 = vld [vmem:[%s7 + $0x18] sm:$0xff]
  %v1473 = vld [vmem:[%s7 + $0x20] sm:$0xff]
  %v1474 = vld [vmem:[%s7 + $0x28] sm:$0xff]
  %v1475 = vld [vmem:[%s7 + $0x30] sm:$0xff]
  %v1476 = vld [vmem:[%s7 + $0x38] sm:$0xff]
  %v1477 = vld [vmem:[%s8] sm:$0x1]
  %v1479 = vlaneseq
  %v1480 = vshrl.u32 %v1479, 7
  %v1481 = vsub.s32 0, %v1480
  %v1482 = vrot.slane %v1477, %v1481
  %vm1484 = vcmask 523264
  %v1486 = vsel %vm1484, %v1468, 0
  %1488 = vmatprep.subr.mxu0 0.0
  %v1489 = vand.u32 %v1469, 4294901760
  %1490 = vmatpush1.msra.mxu0 %v1489
  %1491 = vmatprep.subr.mxu0 0.0
  %v1492 = vand.u32 %v1470, 4294901760
  %1493 = vmatpush1.msra.mxu0 %v1492
  %1494 = vmatprep.subr.mxu0 0.0
  %v1495 = vand.u32 %v1471, 4294901760
  %1496 = vmatpush1.msra.mxu0 %v1495
  %1497 = vmatprep.subr.mxu0 0.0
  %v1498 = vand.u32 %v1472, 4294901760
  %1499 = vmatpush1.msra.mxu0 %v1498
  %1500 = vmatprep.subr.mxu0 0.0
  %v1501 = vand.u32 %v1473, 4294901760
  %1502 = vmatpush1.msra.mxu0 %v1501
  %1503 = vmatprep.subr.mxu0 0.0
  %v1504 = vand.u32 %v1474, 4294901760
  %1505 = vmatpush1.msra.mxu0 %v1504
  %1506 = vmatprep.subr.mxu0 0.0
  %v1507 = vand.u32 %v1475, 4294901760
  %1508 = vmatpush1.msra.mxu0 %v1507
  %1509 = vmatprep.subr.mxu0 0.0
  %v1510 = vand.u32 %v1476, 4294901760
  %1511 = vmatpush1.msra.mxu0 %v1510
  %1512 = vmatprep.subr.mxu0 0.0
  %1513 = vmatpush1.msra.mxu0 0.0
  %1514 = vmatprep.subr.mxu0 0.0
  %1515 = vmatpush1.msra.mxu0 0.0
  %1516 = vmatprep.subr.mxu0 0.0
  %1517 = vmatpush1.msra.mxu0 0.0
  %1518 = vmatprep.subr.mxu0 0.0
  %1519 = vmatpush1.msra.mxu0 0.0
  %1520 = vmatprep.subr.mxu0 0.0
  %1521 = vmatpush1.msra.mxu0 0.0
  %1522 = vmatprep.subr.mxu0 0.0
  %1523 = vmatpush1.msra.mxu0 0.0
  %1524 = vmatprep.subr.mxu0 0.0
  %1525 = vmatpush1.msra.mxu0 0.0
  %1526 = vmatprep.subr.mxu0 0.0
  %1527 = vmatpush1.msra.mxu0 0.0
  %1528 = vmatprep.subr.mxu0 0.0
  %1529 = vmatpush1.msra.mxu0 0.0
  %1530 = vmatprep.subr.mxu0 0.0
  %1531 = vmatpush1.msra.mxu0 0.0
  %1532 = vmatprep.subr.mxu0 0.0
  %1533 = vmatpush1.msra.mxu0 0.0
  %1534 = vmatprep.subr.mxu0 0.0
  %1535 = vmatpush1.msra.mxu0 0.0
  %1536 = vmatprep.subr.mxu0 0.0
  %1537 = vmatpush1.msra.mxu0 0.0
  %1538 = vmatprep.subr.mxu0 0.0
  %1539 = vmatpush1.msra.mxu0 0.0
  %1540 = vmatprep.subr.mxu0 0.0
  %1541 = vmatpush1.msra.mxu0 0.0
  %1542 = vmatprep.subr.mxu0 0.0
  %1543 = vmatpush1.msra.mxu0 0.0
  %1544 = vmatprep.subr.mxu0 0.0
  %1545 = vmatpush1.msra.mxu0 0.0
  %1546 = vmatprep.subr.mxu0 0.0
  %1547 = vmatpush1.msra.mxu0 0.0
  %1548 = vmatprep.subr.mxu0 0.0
  %1549 = vmatpush1.msra.mxu0 0.0
  %1550 = vmatprep.subr.mxu0 0.0
  %1551 = vmatpush1.msra.mxu0 0.0
  %1552 = vmatprep.subr.mxu0 0.0
  %1553 = vmatpush1.msra.mxu0 0.0
  %1554 = vmatprep.subr.mxu0 0.0
  %1555 = vmatpush1.msra.mxu0 0.0
  %1556 = vmatprep.subr.mxu0 0.0
  %1557 = vmatpush1.msra.mxu0 0.0
  %1558 = vmatprep.subr.mxu0 0.0
  %1559 = vmatpush1.msra.mxu0 0.0
  %1560 = vmatprep.mubr.f32.mxu0 0.0
  %v1561 = vand.u32 %v1486, 4294901760
  %v1562 = vsub.f32 %v1486, %v1561
  %v1563 = vand.u32 %v1562, 4294901760
  %v1564 = vsub.f32 %v1562, %v1563
  %v1565 = vand.u32 %v1564, 4294901760
  %1566 = vmatmul.mubr.f32.gmra.mrb[0].mxu0 %v1565
  %v1567 = vpop.f32.mrb[0].mxu0
  %v1568 = vadd.f32 %v1482, %v1567
  %v1569 = vpop.f32.mrb[0].mxu0
  %1570 = vdwg.mxu0
  %1571 = vmatprep.subr.mxu0 0.0
  %v1572 = vand.u32 %v1469, 4294901760
  %v1573 = vsub.f32 %v1469, %v1572
  %v1574 = vand.u32 %v1573, 4294901760
  %v1575 = vsub.f32 %v1573, %v1574
  %v1576 = vand.u32 %v1575, 4294901760
  %1577 = vmatpush1.msra.mxu0 %v1576
  %1578 = vmatprep.subr.mxu0 0.0
  %v1579 = vand.u32 %v1470, 4294901760
  %v1580 = vsub.f32 %v1470, %v1579
  %v1581 = vand.u32 %v1580, 4294901760
  %v1582 = vsub.f32 %v1580, %v1581
  %v1583 = vand.u32 %v1582, 4294901760
  %1584 = vmatpush1.msra.mxu0 %v1583
  %1585 = vmatprep.subr.mxu0 0.0
  %v1586 = vand.u32 %v1471, 4294901760
  %v1587 = vsub.f32 %v1471, %v1586
  %v1588 = vand.u32 %v1587, 4294901760
  %v1589 = vsub.f32 %v1587, %v1588
  %v1590 = vand.u32 %v1589, 4294901760
  %1591 = vmatpush1.msra.mxu0 %v1590
  %1592 = vmatprep.subr.mxu0 0.0
  %v1593 = vand.u32 %v1472, 4294901760
  %v1594 = vsub.f32 %v1472, %v1593
  %v1595 = vand.u32 %v1594, 4294901760
  %v1596 = vsub.f32 %v1594, %v1595
  %v1597 = vand.u32 %v1596, 4294901760
  %1598 = vmatpush1.msra.mxu0 %v1597
  %1599 = vmatprep.subr.mxu0 0.0
  %v1600 = vand.u32 %v1473, 4294901760
  %v1601 = vsub.f32 %v1473, %v1600
  %v1602 = vand.u32 %v1601, 4294901760
  %v1603 = vsub.f32 %v1601, %v1602
  %v1604 = vand.u32 %v1603, 4294901760
  %1605 = vmatpush1.msra.mxu0 %v1604
  %1606 = vmatprep.subr.mxu0 0.0
  %v1607 = vand.u32 %v1474, 4294901760
  %v1608 = vsub.f32 %v1474, %v1607
  %v1609 = vand.u32 %v1608, 4294901760
  %v1610 = vsub.f32 %v1608, %v1609
  %v1611 = vand.u32 %v1610, 4294901760
  %1612 = vmatpush1.msra.mxu0 %v1611
  %1613 = vmatprep.subr.mxu0 0.0
  %v1614 = vand.u32 %v1475, 4294901760
  %v1615 = vsub.f32 %v1475, %v1614
  %v1616 = vand.u32 %v1615, 4294901760
  %v1617 = vsub.f32 %v1615, %v1616
  %v1618 = vand.u32 %v1617, 4294901760
  %1619 = vmatpush1.msra.mxu0 %v1618
  %1620 = vmatprep.subr.mxu0 0.0
  %v1621 = vand.u32 %v1476, 4294901760
  %v1622 = vsub.f32 %v1476, %v1621
  %v1623 = vand.u32 %v1622, 4294901760
  %v1624 = vsub.f32 %v1622, %v1623
  %v1625 = vand.u32 %v1624, 4294901760
  %1626 = vmatpush1.msra.mxu0 %v1625
  %1627 = vmatprep.subr.mxu0 0.0
  %1628 = vmatpush1.msra.mxu0 0.0
  %1629 = vmatprep.subr.mxu0 0.0
  %1630 = vmatpush1.msra.mxu0 0.0
  %1631 = vmatprep.subr.mxu0 0.0
  %1632 = vmatpush1.msra.mxu0 0.0
  %1633 = vmatprep.subr.mxu0 0.0
  %1634 = vmatpush1.msra.mxu0 0.0
  %1635 = vmatprep.subr.mxu0 0.0
  %1636 = vmatpush1.msra.mxu0 0.0
  %1637 = vmatprep.subr.mxu0 0.0
  %1638 = vmatpush1.msra.mxu0 0.0
  %1639 = vmatprep.subr.mxu0 0.0
  %1640 = vmatpush1.msra.mxu0 0.0
  %1641 = vmatprep.subr.mxu0 0.0
  %1642 = vmatpush1.msra.mxu0 0.0
  %1643 = vmatprep.subr.mxu0 0.0
  %1644 = vmatpush1.msra.mxu0 0.0
  %1645 = vmatprep.subr.mxu0 0.0
  %1646 = vmatpush1.msra.mxu0 0.0
  %1647 = vmatprep.subr.mxu0 0.0
  %1648 = vmatpush1.msra.mxu0 0.0
  %1649 = vmatprep.subr.mxu0 0.0
  %1650 = vmatpush1.msra.mxu0 0.0
  %1651 = vmatprep.subr.mxu0 0.0
  %1652 = vmatpush1.msra.mxu0 0.0
  %1653 = vmatprep.subr.mxu0 0.0
  %1654 = vmatpush1.msra.mxu0 0.0
  %1655 = vmatprep.subr.mxu0 0.0
  %1656 = vmatpush1.msra.mxu0 0.0
  %1657 = vmatprep.subr.mxu0 0.0
  %1658 = vmatpush1.msra.mxu0 0.0
  %1659 = vmatprep.subr.mxu0 0.0
  %1660 = vmatpush1.msra.mxu0 0.0
  %1661 = vmatprep.subr.mxu0 0.0
  %1662 = vmatpush1.msra.mxu0 0.0
  %1663 = vmatprep.subr.mxu0 0.0
  %1664 = vmatpush1.msra.mxu0 0.0
  %1665 = vmatprep.subr.mxu0 0.0
  %1666 = vmatpush1.msra.mxu0 0.0
  %1667 = vmatprep.subr.mxu0 0.0
  %1668 = vmatpush1.msra.mxu0 0.0
  %1669 = vmatprep.subr.mxu0 0.0
  %1670 = vmatpush1.msra.mxu0 0.0
  %1671 = vmatprep.subr.mxu0 0.0
  %1672 = vmatpush1.msra.mxu0 0.0
  %1673 = vmatprep.subr.mxu0 0.0
  %1674 = vmatpush1.msra.mxu0 0.0
  %1675 = vmatprep.mubr.f32.mxu0 0.0
  %v1676 = vand.u32 %v1486, 4294901760
  %1677 = vmatmul.mubr.f32.gmra.mrb[0].mxu0 %v1676
  %v1678 = vpop.f32.mrb[0].mxu0
  %v1679 = vadd.f32 %v1568, %v1678
  %v1680 = vpop.f32.mrb[0].mxu0
  %1681 = vdwg.mxu0
  %1682 = vmatprep.subr.mxu0 0.0
  %v1683 = vand.u32 %v1469, 4294901760
  %v1684 = vsub.f32 %v1469, %v1683
  %1685 = vmatpush1.msra.mxu0 %v1684
  %1686 = vmatprep.subr.mxu0 0.0
  %v1687 = vand.u32 %v1470, 4294901760
  %v1688 = vsub.f32 %v1470, %v1687
  %1689 = vmatpush1.msra.mxu0 %v1688
  %1690 = vmatprep.subr.mxu0 0.0
  %v1691 = vand.u32 %v1471, 4294901760
  %v1692 = vsub.f32 %v1471, %v1691
  %1693 = vmatpush1.msra.mxu0 %v1692
  %1694 = vmatprep.subr.mxu0 0.0
  %v1695 = vand.u32 %v1472, 4294901760
  %v1696 = vsub.f32 %v1472, %v1695
  %1697 = vmatpush1.msra.mxu0 %v1696
  %1698 = vmatprep.subr.mxu0 0.0
  %v1699 = vand.u32 %v1473, 4294901760
  %v1700 = vsub.f32 %v1473, %v1699
  %1701 = vmatpush1.msra.mxu0 %v1700
  %1702 = vmatprep.subr.mxu0 0.0
  %v1703 = vand.u32 %v1474, 4294901760
  %v1704 = vsub.f32 %v1474, %v1703
  %1705 = vmatpush1.msra.mxu0 %v1704
  %1706 = vmatprep.subr.mxu0 0.0
  %v1707 = vand.u32 %v1475, 4294901760
  %v1708 = vsub.f32 %v1475, %v1707
  %1709 = vmatpush1.msra.mxu0 %v1708
  %1710 = vmatprep.subr.mxu0 0.0
  %v1711 = vand.u32 %v1476, 4294901760
  %v1712 = vsub.f32 %v1476, %v1711
  %1713 = vmatpush1.msra.mxu0 %v1712
  %1714 = vmatprep.subr.mxu0 0.0
  %1715 = vmatpush1.msra.mxu0 0.0
  %1716 = vmatprep.subr.mxu0 0.0
  %1717 = vmatpush1.msra.mxu0 0.0
  %1718 = vmatprep.subr.mxu0 0.0
  %1719 = vmatpush1.msra.mxu0 0.0
  %1720 = vmatprep.subr.mxu0 0.0
  %1721 = vmatpush1.msra.mxu0 0.0
  %1722 = vmatprep.subr.mxu0 0.0
  %1723 = vmatpush1.msra.mxu0 0.0
  %1724 = vmatprep.subr.mxu0 0.0
  %1725 = vmatpush1.msra.mxu0 0.0
  %1726 = vmatprep.subr.mxu0 0.0
  %1727 = vmatpush1.msra.mxu0 0.0
  %1728 = vmatprep.subr.mxu0 0.0
  %1729 = vmatpush1.msra.mxu0 0.0
  %1730 = vmatprep.subr.mxu0 0.0
  %1731 = vmatpush1.msra.mxu0 0.0
  %1732 = vmatprep.subr.mxu0 0.0
  %1733 = vmatpush1.msra.mxu0 0.0
  %1734 = vmatprep.subr.mxu0 0.0
  %1735 = vmatpush1.msra.mxu0 0.0
  %1736 = vmatprep.subr.mxu0 0.0
  %1737 = vmatpush1.msra.mxu0 0.0
  %1738 = vmatprep.subr.mxu0 0.0
  %1739 = vmatpush1.msra.mxu0 0.0
  %1740 = vmatprep.subr.mxu0 0.0
  %1741 = vmatpush1.msra.mxu0 0.0
  %1742 = vmatprep.subr.mxu0 0.0
  %1743 = vmatpush1.msra.mxu0 0.0
  %1744 = vmatprep.subr.mxu0 0.0
  %1745 = vmatpush1.msra.mxu0 0.0
  %1746 = vmatprep.subr.mxu0 0.0
  %1747 = vmatpush1.msra.mxu0 0.0
  %1748 = vmatprep.subr.mxu0 0.0
  %1749 = vmatpush1.msra.mxu0 0.0
  %1750 = vmatprep.subr.mxu0 0.0
  %1751 = vmatpush1.msra.mxu0 0.0
  %1752 = vmatprep.subr.mxu0 0.0
  %1753 = vmatpush1.msra.mxu0 0.0
  %1754 = vmatprep.subr.mxu0 0.0
  %1755 = vmatpush1.msra.mxu0 0.0
  %1756 = vmatprep.subr.mxu0 0.0
  %1757 = vmatpush1.msra.mxu0 0.0
  %1758 = vmatprep.subr.mxu0 0.0
  %1759 = vmatpush1.msra.mxu0 0.0
  %1760 = vmatprep.subr.mxu0 0.0
  %1761 = vmatpush1.msra.mxu0 0.0
  %1762 = vmatprep.mubr.f32.mxu0 0.0
  %v1763 = vand.u32 %v1486, 4294901760
  %v1764 = vsub.f32 %v1486, %v1763
  %1765 = vmatmul.mubr.f32.gmra.mrb[0].mxu0 %v1764
  %v1766 = vpop.f32.mrb[0].mxu0
  %v1767 = vadd.f32 %v1679, %v1766
  %v1768 = vpop.f32.mrb[0].mxu0
  %1769 = vdwg.mxu0
  %1770 = vmatprep.subr.mxu0 0.0
  %v1771 = vand.u32 %v1469, 4294901760
  %1772 = vmatpush1.msra.mxu0 %v1771
  %1773 = vmatprep.subr.mxu0 0.0
  %v1774 = vand.u32 %v1470, 4294901760
  %1775 = vmatpush1.msra.mxu0 %v1774
  %1776 = vmatprep.subr.mxu0 0.0
  %v1777 = vand.u32 %v1471, 4294901760
  %1778 = vmatpush1.msra.mxu0 %v1777
  %1779 = vmatprep.subr.mxu0 0.0
  %v1780 = vand.u32 %v1472, 4294901760
  %1781 = vmatpush1.msra.mxu0 %v1780
  %1782 = vmatprep.subr.mxu0 0.0
  %v1783 = vand.u32 %v1473, 4294901760
  %1784 = vmatpush1.msra.mxu0 %v1783
  %1785 = vmatprep.subr.mxu0 0.0
  %v1786 = vand.u32 %v1474, 4294901760
  %1787 = vmatpush1.msra.mxu0 %v1786
  %1788 = vmatprep.subr.mxu0 0.0
  %v1789 = vand.u32 %v1475, 4294901760
  %1790 = vmatpush1.msra.mxu0 %v1789
  %1791 = vmatprep.subr.mxu0 0.0
  %v1792 = vand.u32 %v1476, 4294901760
  %1793 = vmatpush1.msra.mxu0 %v1792
  %1794 = vmatprep.subr.mxu0 0.0
  %1795 = vmatpush1.msra.mxu0 0.0
  %1796 = vmatprep.subr.mxu0 0.0
  %1797 = vmatpush1.msra.mxu0 0.0
  %1798 = vmatprep.subr.mxu0 0.0
  %1799 = vmatpush1.msra.mxu0 0.0
  %1800 = vmatprep.subr.mxu0 0.0
  %1801 = vmatpush1.msra.mxu0 0.0
  %1802 = vmatprep.subr.mxu0 0.0
  %1803 = vmatpush1.msra.mxu0 0.0
  %1804 = vmatprep.subr.mxu0 0.0
  %1805 = vmatpush1.msra.mxu0 0.0
  %1806 = vmatprep.subr.mxu0 0.0
  %1807 = vmatpush1.msra.mxu0 0.0
  %1808 = vmatprep.subr.mxu0 0.0
  %1809 = vmatpush1.msra.mxu0 0.0
  %1810 = vmatprep.subr.mxu0 0.0
  %1811 = vmatpush1.msra.mxu0 0.0
  %1812 = vmatprep.subr.mxu0 0.0
  %1813 = vmatpush1.msra.mxu0 0.0
  %1814 = vmatprep.subr.mxu0 0.0
  %1815 = vmatpush1.msra.mxu0 0.0
  %1816 = vmatprep.subr.mxu0 0.0
  %1817 = vmatpush1.msra.mxu0 0.0
  %1818 = vmatprep.subr.mxu0 0.0
  %1819 = vmatpush1.msra.mxu0 0.0
  %1820 = vmatprep.subr.mxu0 0.0
  %1821 = vmatpush1.msra.mxu0 0.0
  %1822 = vmatprep.subr.mxu0 0.0
  %1823 = vmatpush1.msra.mxu0 0.0
  %1824 = vmatprep.subr.mxu0 0.0
  %1825 = vmatpush1.msra.mxu0 0.0
  %1826 = vmatprep.subr.mxu0 0.0
  %1827 = vmatpush1.msra.mxu0 0.0
  %1828 = vmatprep.subr.mxu0 0.0
  %1829 = vmatpush1.msra.mxu0 0.0
  %1830 = vmatprep.subr.mxu0 0.0
  %1831 = vmatpush1.msra.mxu0 0.0
  %1832 = vmatprep.subr.mxu0 0.0
  %1833 = vmatpush1.msra.mxu0 0.0
  %1834 = vmatprep.subr.mxu0 0.0
  %1835 = vmatpush1.msra.mxu0 0.0
  %1836 = vmatprep.subr.mxu0 0.0
  %1837 = vmatpush1.msra.mxu0 0.0
  %1838 = vmatprep.subr.mxu0 0.0
  %1839 = vmatpush1.msra.mxu0 0.0
  %1840 = vmatprep.subr.mxu0 0.0
  %1841 = vmatpush1.msra.mxu0 0.0
  %1842 = vmatprep.mubr.f32.mxu0 0.0
  %v1843 = vand.u32 %v1486, 4294901760
  %v1844 = vsub.f32 %v1486, %v1843
  %v1845 = vand.u32 %v1844, 4294901760
  %1846 = vmatmul.mubr.f32.gmra.mrb[0].mxu0 %v1845
  %v1847 = vpop.f32.mrb[0].mxu0
  %v1848 = vadd.f32 %v1767, %v1847
  %v1849 = vpop.f32.mrb[0].mxu0
  %1850 = vdwg.mxu0
  %1851 = vmatprep.subr.mxu0 0.0
  %v1852 = vand.u32 %v1469, 4294901760
  %v1853 = vsub.f32 %v1469, %v1852
  %v1854 = vand.u32 %v1853, 4294901760
  %1855 = vmatpush1.msra.mxu0 %v1854
  %1856 = vmatprep.subr.mxu0 0.0
  %v1857 = vand.u32 %v1470, 4294901760
  %v1858 = vsub.f32 %v1470, %v1857
  %v1859 = vand.u32 %v1858, 4294901760
  %1860 = vmatpush1.msra.mxu0 %v1859
  %1861 = vmatprep.subr.mxu0 0.0
  %v1862 = vand.u32 %v1471, 4294901760
  %v1863 = vsub.f32 %v1471, %v1862
  %v1864 = vand.u32 %v1863, 4294901760
  %1865 = vmatpush1.msra.mxu0 %v1864
  %1866 = vmatprep.subr.mxu0 0.0
  %v1867 = vand.u32 %v1472, 4294901760
  %v1868 = vsub.f32 %v1472, %v1867
  %v1869 = vand.u32 %v1868, 4294901760
  %1870 = vmatpush1.msra.mxu0 %v1869
  %1871 = vmatprep.subr.mxu0 0.0
  %v1872 = vand.u32 %v1473, 4294901760
  %v1873 = vsub.f32 %v1473, %v1872
  %v1874 = vand.u32 %v1873, 4294901760
  %1875 = vmatpush1.msra.mxu0 %v1874
  %1876 = vmatprep.subr.mxu0 0.0
  %v1877 = vand.u32 %v1474, 4294901760
  %v1878 = vsub.f32 %v1474, %v1877
  %v1879 = vand.u32 %v1878, 4294901760
  %1880 = vmatpush1.msra.mxu0 %v1879
  %1881 = vmatprep.subr.mxu0 0.0
  %v1882 = vand.u32 %v1475, 4294901760
  %v1883 = vsub.f32 %v1475, %v1882
  %v1884 = vand.u32 %v1883, 4294901760
  %1885 = vmatpush1.msra.mxu0 %v1884
  %1886 = vmatprep.subr.mxu0 0.0
  %v1887 = vand.u32 %v1476, 4294901760
  %v1888 = vsub.f32 %v1476, %v1887
  %v1889 = vand.u32 %v1888, 4294901760
  %1890 = vmatpush1.msra.mxu0 %v1889
  %1891 = vmatprep.subr.mxu0 0.0
  %1892 = vmatpush1.msra.mxu0 0.0
  %1893 = vmatprep.subr.mxu0 0.0
  %1894 = vmatpush1.msra.mxu0 0.0
  %1895 = vmatprep.subr.mxu0 0.0
  %1896 = vmatpush1.msra.mxu0 0.0
  %1897 = vmatprep.subr.mxu0 0.0
  %1898 = vmatpush1.msra.mxu0 0.0
  %1899 = vmatprep.subr.mxu0 0.0
  %1900 = vmatpush1.msra.mxu0 0.0
  %1901 = vmatprep.subr.mxu0 0.0
  %1902 = vmatpush1.msra.mxu0 0.0
  %1903 = vmatprep.subr.mxu0 0.0
  %1904 = vmatpush1.msra.mxu0 0.0
  %1905 = vmatprep.subr.mxu0 0.0
  %1906 = vmatpush1.msra.mxu0 0.0
  %1907 = vmatprep.subr.mxu0 0.0
  %1908 = vmatpush1.msra.mxu0 0.0
  %1909 = vmatprep.subr.mxu0 0.0
  %1910 = vmatpush1.msra.mxu0 0.0
  %1911 = vmatprep.subr.mxu0 0.0
  %1912 = vmatpush1.msra.mxu0 0.0
  %1913 = vmatprep.subr.mxu0 0.0
  %1914 = vmatpush1.msra.mxu0 0.0
  %1915 = vmatprep.subr.mxu0 0.0
  %1916 = vmatpush1.msra.mxu0 0.0
  %1917 = vmatprep.subr.mxu0 0.0
  %1918 = vmatpush1.msra.mxu0 0.0
  %1919 = vmatprep.subr.mxu0 0.0
  %1920 = vmatpush1.msra.mxu0 0.0
  %1921 = vmatprep.subr.mxu0 0.0
  %1922 = vmatpush1.msra.mxu0 0.0
  %1923 = vmatprep.subr.mxu0 0.0
  %1924 = vmatpush1.msra.mxu0 0.0
  %1925 = vmatprep.subr.mxu0 0.0
  %1926 = vmatpush1.msra.mxu0 0.0
  %1927 = vmatprep.subr.mxu0 0.0
  %1928 = vmatpush1.msra.mxu0 0.0
  %1929 = vmatprep.subr.mxu0 0.0
  %1930 = vmatpush1.msra.mxu0 0.0
  %1931 = vmatprep.subr.mxu0 0.0
  %1932 = vmatpush1.msra.mxu0 0.0
  %1933 = vmatprep.subr.mxu0 0.0
  %1934 = vmatpush1.msra.mxu0 0.0
  %1935 = vmatprep.subr.mxu0 0.0
  %1936 = vmatpush1.msra.mxu0 0.0
  %1937 = vmatprep.subr.mxu0 0.0
  %1938 = vmatpush1.msra.mxu0 0.0
  %1939 = vmatprep.mubr.f32.mxu0 0.0
  %v1940 = vand.u32 %v1486, 4294901760
  %1941 = vmatmul.mubr.f32.gmra.mrb[0].mxu0 %v1940
  %v1942 = vpop.f32.mrb[0].mxu0
  %v1943 = vadd.f32 %v1848, %v1942
  %v1944 = vpop.f32.mrb[0].mxu0
  %1945 = vdwg.mxu0
  %1946 = vmatprep.subr.mxu0 0.0
  %v1947 = vand.u32 %v1469, 4294901760
  %1948 = vmatpush1.msra.mxu0 %v1947
  %1949 = vmatprep.subr.mxu0 0.0
  %v1950 = vand.u32 %v1470, 4294901760
  %1951 = vmatpush1.msra.mxu0 %v1950
  %1952 = vmatprep.subr.mxu0 0.0
  %v1953 = vand.u32 %v1471, 4294901760
  %1954 = vmatpush1.msra.mxu0 %v1953
  %1955 = vmatprep.subr.mxu0 0.0
  %v1956 = vand.u32 %v1472, 4294901760
  %1957 = vmatpush1.msra.mxu0 %v1956
  %1958 = vmatprep.subr.mxu0 0.0
  %v1959 = vand.u32 %v1473, 4294901760
  %1960 = vmatpush1.msra.mxu0 %v1959
  %1961 = vmatprep.subr.mxu0 0.0
  %v1962 = vand.u32 %v1474, 4294901760
  %1963 = vmatpush1.msra.mxu0 %v1962
  %1964 = vmatprep.subr.mxu0 0.0
  %v1965 = vand.u32 %v1475, 4294901760
  %1966 = vmatpush1.msra.mxu0 %v1965
  %1967 = vmatprep.subr.mxu0 0.0
  %v1968 = vand.u32 %v1476, 4294901760
  %1969 = vmatpush1.msra.mxu0 %v1968
  %1970 = vmatprep.subr.mxu0 0.0
  %1971 = vmatpush1.msra.mxu0 0.0
  %1972 = vmatprep.subr.mxu0 0.0
  %1973 = vmatpush1.msra.mxu0 0.0
  %1974 = vmatprep.subr.mxu0 0.0
  %1975 = vmatpush1.msra.mxu0 0.0
  %1976 = vmatprep.subr.mxu0 0.0
  %1977 = vmatpush1.msra.mxu0 0.0
  %1978 = vmatprep.subr.mxu0 0.0
  %1979 = vmatpush1.msra.mxu0 0.0
  %1980 = vmatprep.subr.mxu0 0.0
  %1981 = vmatpush1.msra.mxu0 0.0
  %1982 = vmatprep.subr.mxu0 0.0
  %1983 = vmatpush1.msra.mxu0 0.0
  %1984 = vmatprep.subr.mxu0 0.0
  %1985 = vmatpush1.msra.mxu0 0.0
  %1986 = vmatprep.subr.mxu0 0.0
  %1987 = vmatpush1.msra.mxu0 0.0
  %1988 = vmatprep.subr.mxu0 0.0
  %1989 = vmatpush1.msra.mxu0 0.0
  %1990 = vmatprep.subr.mxu0 0.0
  %1991 = vmatpush1.msra.mxu0 0.0
  %1992 = vmatprep.subr.mxu0 0.0
  %1993 = vmatpush1.msra.mxu0 0.0
  %1994 = vmatprep.subr.mxu0 0.0
  %1995 = vmatpush1.msra.mxu0 0.0
  %1996 = vmatprep.subr.mxu0 0.0
  %1997 = vmatpush1.msra.mxu0 0.0
  %1998 = vmatprep.subr.mxu0 0.0
  %1999 = vmatpush1.msra.mxu0 0.0
  %2000 = vmatprep.subr.mxu0 0.0
  %2001 = vmatpush1.msra.mxu0 0.0
  %2002 = vmatprep.subr.mxu0 0.0
  %2003 = vmatpush1.msra.mxu0 0.0
  %2004 = vmatprep.subr.mxu0 0.0
  %2005 = vmatpush1.msra.mxu0 0.0
  %2006 = vmatprep.subr.mxu0 0.0
  %2007 = vmatpush1.msra.mxu0 0.0
  %2008 = vmatprep.subr.mxu0 0.0
  %2009 = vmatpush1.msra.mxu0 0.0
  %2010 = vmatprep.subr.mxu0 0.0
  %2011 = vmatpush1.msra.mxu0 0.0
  %2012 = vmatprep.subr.mxu0 0.0
  %2013 = vmatpush1.msra.mxu0 0.0
  %2014 = vmatprep.subr.mxu0 0.0
  %2015 = vmatpush1.msra.mxu0 0.0
  %2016 = vmatprep.subr.mxu0 0.0
  %2017 = vmatpush1.msra.mxu0 0.0
  %2018 = vmatprep.mubr.f32.mxu0 0.0
  %v2019 = vand.u32 %v1486, 4294901760
  %2020 = vmatmul.mubr.f32.gmra.mrb[0].mxu0 %v2019
  %v2021 = vpop.f32.mrb[0].mxu0
  %v2022 = vadd.f32 %v1943, %v2021
  %v2023 = vpop.f32.mrb[0].mxu0
  %2024 = vdwg.mxu0
  %vm2025 = vcmask 31744
  %2026 = vst.msk [vmem:[%s9] sm:$0xff] %vm2025, %v2022
  // Predicated region
  $region38: #{qnetwork_forward.1} parent=0 // pred_check
    _
  $region39: #{qnetwork_forward.1} parent=0 // pred_check_branch
    %2028 = sbr.rel (0) target = $region41
  $region40: #{qnetwork_forward.1} parent=0 // pred_region
    _
  $region41: #{qnetwork_forward.1} parent=0 // pred_fallthru
    _
  // Predicated region
  $region42: #{qnetwork_forward.1} parent=0 // pred_check
    _
  $region43: #{qnetwork_forward.1} parent=0 // pred_check_branch
    %2030 = sbr.rel (0) target = $region45
  $region44: #{qnetwork_forward.1} parent=0 // pred_region
    _
  $region45: #{qnetwork_forward.1} parent=0 // pred_fallthru
    _

</llo_original>
